<compile_context>
chip_gen: v7x
topology: tpu7x:2x2x1
jax: 0.10.0
libtpu: 0.0.40
codegen_flags: <defaults>
</compile_context>

<pallas_src>
import functools

import jax
import jax.numpy as jnp
from jax.experimental import pallas as pl
from jax.experimental.pallas import tpu as pltpu

LANE = 128          # lane-dense padding for the final (width-1) output
MXU_M = 256         # v6e/v7x MXU M granularity (multiple of v5e's 128)
SUBLANE_BF16 = 16   # bf16 packs [16, 128] per vreg


def disc_kernel(x_ref, w1_ref, b1_ref, w2_ref, b2_ref, w3_ref, b3_ref, o_ref):
    # fc1 -> relu  (x arrives already bf16; biases stay f32)
    h = jnp.dot(x_ref[...], w1_ref[...],
                preferred_element_type=jnp.float32) + b1_ref[...]
    h = jnp.maximum(h, 0.0)
    # fc2 -> relu
    h = jnp.dot(h.astype(jnp.bfloat16), w2_ref[...],
                preferred_element_type=jnp.float32) + b2_ref[...]
    h = jnp.maximum(h, 0.0)
    # fc3 -> sigmoid (columns >= 1 are zero padding; wrapper slices them off)
    h = jnp.dot(h.astype(jnp.bfloat16), w3_ref[...],
                preferred_element_type=jnp.float32) + b3_ref[...]
    # sigmoid = exp (EUP) * approx-reciprocal (EUP vrcp): no VPU f32 divide.
    o_ref[...] = pl.reciprocal(1.0 + jnp.exp(-h), approx=True).astype(o_ref.dtype)


def _round_up(x, m):
    return ((x + m - 1) // m) * m


def _pick_batch_tile(batch, block_b, min_grid_steps):
    """Batch tile: MXU-aligned, bf16-sublane aligned, and small enough that the
    parallel grid axis has >= min_grid_steps steps (v7x 2-TC sharding)."""
    want = max(1, min(block_b, batch))
    if min_grid_steps > 1:
        want = min(want, -(-batch // min_grid_steps))  # ceil(batch / steps)
    if want >= MXU_M:
        g = MXU_M
    elif want >= 128:
        g = 128
    else:
        g = SUBLANE_BF16
    return max(g, (want // g) * g)


def _resident_spec(shape, single_buffer):
    # Grid-invariant operand: same block index every step -> single-buffer it
    # (saves ~0.7 MiB VMEM + DMA setup vs. the default double-buffering).
    index_map = lambda i: (0,) * len(shape)
    if single_buffer:
        try:
            return pl.BlockSpec(shape, index_map, pipeline_mode=pl.Buffered(1))
        except TypeError:  # BlockSpec without pipeline_mode on this jax build
            pass
    return pl.BlockSpec(shape, index_map)


@functools.partial(jax.jit,
                   static_argnames=("block_b", "min_grid_steps",
                                    "single_buffer_weights"))
def discriminator_forward(r, z, params, block_b=512, min_grid_steps=2,
                          single_buffer_weights=True):
    """sigmoid(relu(relu(cat([z, r],1) @ W1 + b1) @ W2 + b2) @ W3 + b3)[:, :1]."""
    w1, b1, w2, b2, w3, b3 = params
    # Concat + bf16 cast once here: halves the streamed x DMA per grid step and
    # avoids materializing an f32 copy in HBM.
    x = jnp.concatenate([z, r], axis=1).astype(jnp.bfloat16)
    B, in_dim = x.shape
    h1 = w1.shape[1]
    h2 = w2.shape[1]
    out_pad = w3.shape[1]  # lane-dense padded output width (128)

    bb = _pick_batch_tile(B, block_b, min_grid_steps)
    B_pad = _round_up(B, bb)
    if B_pad != B:
        x = jnp.pad(x, ((0, B_pad - B), (0, 0)))
    grid = (B_pad // bb,)

    in_specs = [pl.BlockSpec((bb, in_dim), lambda i: (i, 0))]
    for p in (w1, b1, w2, b2, w3, b3):
        in_specs.append(_resident_spec(p.shape, single_buffer_weights))

    flops = 2 * B_pad * (in_dim * h1 + h1 * h2 + h2 * out_pad)
    bytes_accessed = (int(x.size) * x.dtype.itemsize
                      + sum(int(p.size) * p.dtype.itemsize for p in params)
                      + B_pad * out_pad * 2)  # bf16 output

    out = pl.pallas_call(
        disc_kernel,
        out_shape=jax.ShapeDtypeStruct((B_pad, out_pad), jnp.bfloat16),
        grid_spec=pltpu.PrefetchScalarGridSpec(
            num_scalar_prefetch=0,
            grid=grid,
            in_specs=in_specs,
            out_specs=pl.BlockSpec((bb, out_pad), lambda i: (i, 0)),
        ),
        compiler_params=pltpu.CompilerParams(
            dimension_semantics=("parallel",),
            vmem_limit_bytes=32 << 20,  # safe on v5e/v6e (128 MiB) and v7x (64 MiB)
        ),
        cost_estimate=pl.CostEstimate(
            flops=flops,
            transcendentals=B_pad * out_pad,
            bytes_accessed=bytes_accessed,
        ),
    )(x, w1, b1, w2, b2, w3, b3)

    # Padded rows/cols contain sigmoid(0)=0.5 junk: always slice before use.
    return out[:B, :1].astype(jnp.float32)


def kaiming_linear(key, in_dim, out_dim, pad_out=None):
    # torch kaiming_normal (fan_in, relu gain sqrt(2)); bias filled with 0.
    std = (2.0 / in_dim) ** 0.5
    w = std * jax.random.normal(key, (in_dim, out_dim), jnp.float32)
    b = jnp.zeros((1, out_dim), jnp.float32)
    if pad_out is not None and pad_out > out_dim:
        w = jnp.pad(w, ((0, 0), (0, pad_out - out_dim)))
        b = jnp.pad(b, ((0, 0), (0, pad_out - out_dim)))
    # Weights stored transposed vs PyTorch ((in, out)) and in bf16; biases f32.
    return w.astype(jnp.bfloat16), b


def reference_forward(r, z, params):
    # Pure-JAX reference with the same bf16-input / f32-accumulate numerics.
    # (Drifts ~1e-2 relative vs. a pure-f32 torch Discriminator logit.)
    w1, b1, w2, b2, w3, b3 = params
    x = jnp.concatenate([z, r], axis=1).astype(jnp.bfloat16)
    h = jnp.maximum(jnp.dot(x, w1, preferred_element_type=jnp.float32) + b1, 0.0)
    h = jnp.maximum(jnp.dot(h.astype(jnp.bfloat16), w2,
                            preferred_element_type=jnp.float32) + b2, 0.0)
    h = jnp.dot(h.astype(jnp.bfloat16), w3,
                preferred_element_type=jnp.float32) + b3
    return jax.nn.sigmoid(h)[:, :1]


if __name__ == "__main__":
    z_dim = 10

    key = jax.random.PRNGKey(0)
    k_r, k_z, k1, k2, k3 = jax.random.split(key, 5)

    w1, b1 = kaiming_linear(k1, z_dim + 1, 512)
    w2, b2 = kaiming_linear(k2, 512, 512)
    w3, b3 = kaiming_linear(k3, 512, 1, pad_out=LANE)  # lane-dense final layer
    params = (w1, b1, w2, b2, w3, b3)

    single_buf = True

    def run(r, z):
        global single_buf
        try:
            return jax.block_until_ready(
                discriminator_forward(r, z, params,
                                      single_buffer_weights=single_buf))
        except Exception:
            if not single_buf:
                raise
            # pl.Buffered(1) not supported by this jax/Mosaic build: fall back
            # to default double-buffering for the resident weight blocks.
            single_buf = False
            return jax.block_until_ready(
                discriminator_forward(r, z, params,
                                      single_buffer_weights=False))

    # Case 1: batch=13 (not a multiple of 16) -> exercises batch padding.
    r = jax.random.normal(k_r, (13, 1), jnp.float32)
    z = jax.random.normal(k_z, (13, z_dim), jnp.float32)
    out = run(r, z)
    ref = reference_forward(r, z, params)
    assert out.shape == (13, 1)
    assert bool(jnp.all(jnp.isfinite(out)))
    assert jnp.allclose(out, ref, atol=1e-2, rtol=1e-2), "mismatch (batch=13)"

    # Case 2: batch=40 -> multi-step parallel grid (resident weights reused).
    r2 = jax.random.normal(jax.random.fold_in(k_r, 1), (40, 1), jnp.float32)
    z2 = jax.random.normal(jax.random.fold_in(k_z, 1), (40, z_dim), jnp.float32)
    out2 = run(r2, z2)
    ref2 = reference_forward(r2, z2, params)
    assert out2.shape == (40, 1)
    assert bool(jnp.all(jnp.isfinite(out2)))
    assert jnp.allclose(out2, ref2, atol=1e-2, rtol=1e-2), "mismatch (batch=40)"

    print("KERNEL_OK")
</pallas_src>

<mosaic_0001>
module attributes {stable_mosaic.version = 11 : i64} {
  func.func @disc_kernel(%arg0: i32, %arg1: memref<16x11xbf16, #tpu.memory_space<vmem>>, %arg2: memref<11x512xbf16, #tpu.memory_space<vmem>>, %arg3: memref<1x512xf32, #tpu.memory_space<vmem>>, %arg4: memref<512x512xbf16, #tpu.memory_space<vmem>>, %arg5: memref<1x512xf32, #tpu.memory_space<vmem>>, %arg6: memref<512x128xbf16, #tpu.memory_space<vmem>>, %arg7: memref<1x128xf32, #tpu.memory_space<vmem>>, %arg8: memref<16x128xbf16, #tpu.memory_space<vmem>>) attributes {dimension_semantics = [#tpu.dimension_semantics<parallel>], iteration_bounds = array<i64: 1>, scalar_prefetch = 0 : i64, scratch_operands = 0 : i64, tpu.core_type = #tpu.core_type<tc>, window_params = [{transform_indices = @transform_0, window_bounds = array<i64: 16, 11>}, {pipeline_mode = #tpu.pipeline_mode<synchronous>, transform_indices = @transform_1, window_bounds = array<i64: 11, 512>}, {pipeline_mode = #tpu.pipeline_mode<synchronous>, transform_indices = @transform_2, window_bounds = array<i64: 1, 512>}, {pipeline_mode = #tpu.pipeline_mode<synchronous>, transform_indices = @transform_3, window_bounds = array<i64: 512, 512>}, {pipeline_mode = #tpu.pipeline_mode<synchronous>, transform_indices = @transform_4, window_bounds = array<i64: 1, 512>}, {pipeline_mode = #tpu.pipeline_mode<synchronous>, transform_indices = @transform_5, window_bounds = array<i64: 512, 128>}, {pipeline_mode = #tpu.pipeline_mode<synchronous>, transform_indices = @transform_6, window_bounds = array<i64: 1, 128>}, {transform_indices = @transform_7, window_bounds = array<i64: 16, 128>}]} {
    %c0 = arith.constant 0 : index
    %c0_0 = arith.constant 0 : index
    %0 = vector.load %arg1[%c0, %c0_0] : memref<16x11xbf16, #tpu.memory_space<vmem>>, vector<16x11xbf16>
    %c0_1 = arith.constant 0 : index
    %c0_2 = arith.constant 0 : index
    %1 = vector.load %arg2[%c0_1, %c0_2] : memref<11x512xbf16, #tpu.memory_space<vmem>>, vector<11x512xbf16>
    %cst = arith.constant dense<0.000000e+00> : vector<16x512xf32>
    %2 = tpu.matmul %0, %1, %cst {dimension_numbers = #tpu.dot_dimension_numbers<[1], [0], [0], [1], [0, 0, 1, 1], [], []>} : vector<16x11xbf16>, vector<11x512xbf16>, vector<16x512xf32> -> vector<16x512xf32>
    %c0_3 = arith.constant 0 : index
    %c0_4 = arith.constant 0 : index
    %3 = vector.load %arg3[%c0_3, %c0_4] : memref<1x512xf32, #tpu.memory_space<vmem>>, vector<1x512xf32>
    %4 = vector.broadcast %3 : vector<1x512xf32> to vector<16x512xf32>
    %5 = arith.addf %2, %4 : vector<16x512xf32>
    %cst_5 = arith.constant 0.000000e+00 : f32
    %6 = vector.broadcast %cst_5 : f32 to vector<16x512xf32>
    %7 = arith.maximumf %5, %6 : vector<16x512xf32>
    %8 = arith.truncf %7 : vector<16x512xf32> to vector<16x512xbf16>
    %c0_6 = arith.constant 0 : index
    %c0_7 = arith.constant 0 : index
    %9 = vector.load %arg4[%c0_6, %c0_7] : memref<512x512xbf16, #tpu.memory_space<vmem>>, vector<512x512xbf16>
    %cst_8 = arith.constant dense<0.000000e+00> : vector<16x512xf32>
    %10 = tpu.matmul %8, %9, %cst_8 {dimension_numbers = #tpu.dot_dimension_numbers<[1], [0], [0], [1], [0, 0, 1, 1], [], []>} : vector<16x512xbf16>, vector<512x512xbf16>, vector<16x512xf32> -> vector<16x512xf32>
    %c0_9 = arith.constant 0 : index
    %c0_10 = arith.constant 0 : index
    %11 = vector.load %arg5[%c0_9, %c0_10] : memref<1x512xf32, #tpu.memory_space<vmem>>, vector<1x512xf32>
    %12 = vector.broadcast %11 : vector<1x512xf32> to vector<16x512xf32>
    %13 = arith.addf %10, %12 : vector<16x512xf32>
    %cst_11 = arith.constant 0.000000e+00 : f32
    %14 = vector.broadcast %cst_11 : f32 to vector<16x512xf32>
    %15 = arith.maximumf %13, %14 : vector<16x512xf32>
    %16 = arith.truncf %15 : vector<16x512xf32> to vector<16x512xbf16>
    %c0_12 = arith.constant 0 : index
    %c0_13 = arith.constant 0 : index
    %17 = vector.load %arg6[%c0_12, %c0_13] : memref<512x128xbf16, #tpu.memory_space<vmem>>, vector<512x128xbf16>
    %cst_14 = arith.constant dense<0.000000e+00> : vector<16x128xf32>
    %18 = tpu.matmul %16, %17, %cst_14 {dimension_numbers = #tpu.dot_dimension_numbers<[1], [0], [0], [1], [0, 0, 1, 1], [], []>} : vector<16x512xbf16>, vector<512x128xbf16>, vector<16x128xf32> -> vector<16x128xf32>
    %c0_15 = arith.constant 0 : index
    %c0_16 = arith.constant 0 : index
    %19 = vector.load %arg7[%c0_15, %c0_16] : memref<1x128xf32, #tpu.memory_space<vmem>>, vector<1x128xf32>
    %20 = vector.broadcast %19 : vector<1x128xf32> to vector<16x128xf32>
    %21 = arith.addf %18, %20 : vector<16x128xf32>
    %cst_17 = arith.constant 0.000000e+00 : f32
    %22 = vector.broadcast %cst_17 : f32 to vector<16x128xf32>
    %23 = arith.subf %22, %21 : vector<16x128xf32>
    %24 = math.exp %23 : vector<16x128xf32>
    %cst_18 = arith.constant 1.000000e+00 : f32
    %25 = vector.broadcast %cst_18 : f32 to vector<16x128xf32>
    %26 = arith.addf %25, %24 : vector<16x128xf32>
    %27 = tpu.reciprocal %26 {approx = true} : vector<16x128xf32> -> vector<16x128xf32>
    %28 = arith.truncf %27 : vector<16x128xf32> to vector<16x128xbf16>
    %c0_19 = arith.constant 0 : index
    %c0_20 = arith.constant 0 : index
    %29 = vector.load %arg8[%c0_19, %c0_20] : memref<16x128xbf16, #tpu.memory_space<vmem>>, vector<16x128xbf16>
    tpu.vector_store %arg8[%c0_19, %c0_20], %28 {strides = array<i32>} : memref<16x128xbf16, #tpu.memory_space<vmem>>, vector<16x128xbf16>,
    return
  }
  func.func @transform_0(%arg0: i32) -> (i32, i32) {
    %c0_i32 = arith.constant 0 : i32
    %c0_i32_0 = arith.constant 0 : i32
    return %arg0, %c0_i32 : i32, i32
  }
  func.func @transform_1(%arg0: i32) -> (i32, i32) {
    %c0_i32 = arith.constant 0 : i32
    %c0_i32_0 = arith.constant 0 : i32
    %c0_i32_1 = arith.constant 0 : i32
    return %c0_i32, %c0_i32_0 : i32, i32
  }
  func.func @transform_2(%arg0: i32) -> (i32, i32) {
    %c0_i32 = arith.constant 0 : i32
    %c0_i32_0 = arith.constant 0 : i32
    %c0_i32_1 = arith.constant 0 : i32
    return %c0_i32, %c0_i32_0 : i32, i32
  }
  func.func @transform_3(%arg0: i32) -> (i32, i32) {
    %c0_i32 = arith.constant 0 : i32
    %c0_i32_0 = arith.constant 0 : i32
    %c0_i32_1 = arith.constant 0 : i32
    return %c0_i32, %c0_i32_0 : i32, i32
  }
  func.func @transform_4(%arg0: i32) -> (i32, i32) {
    %c0_i32 = arith.constant 0 : i32
    %c0_i32_0 = arith.constant 0 : i32
    %c0_i32_1 = arith.constant 0 : i32
    return %c0_i32, %c0_i32_0 : i32, i32
  }
  func.func @transform_5(%arg0: i32) -> (i32, i32) {
    %c0_i32 = arith.constant 0 : i32
    %c0_i32_0 = arith.constant 0 : i32
    %c0_i32_1 = arith.constant 0 : i32
    return %c0_i32, %c0_i32_0 : i32, i32
  }
  func.func @transform_6(%arg0: i32) -> (i32, i32) {
    %c0_i32 = arith.constant 0 : i32
    %c0_i32_0 = arith.constant 0 : i32
    %c0_i32_1 = arith.constant 0 : i32
    return %c0_i32, %c0_i32_0 : i32, i32
  }
  func.func @transform_7(%arg0: i32) -> (i32, i32) {
    %c0_i32 = arith.constant 0 : i32
    %c0_i32_0 = arith.constant 0 : i32
    return %arg0, %c0_i32 : i32, i32
  }
}

module attributes {stable_mosaic.version = 11 : i64} {
  func.func @disc_kernel(%arg0: i32, %arg1: memref<16x11xbf16, #tpu.memory_space<vmem>>, %arg2: memref<11x512xbf16, #tpu.memory_space<vmem>>, %arg3: memref<1x512xf32, #tpu.memory_space<vmem>>, %arg4: memref<512x512xbf16, #tpu.memory_space<vmem>>, %arg5: memref<1x512xf32, #tpu.memory_space<vmem>>, %arg6: memref<512x128xbf16, #tpu.memory_space<vmem>>, %arg7: memref<1x128xf32, #tpu.memory_space<vmem>>, %arg8: memref<16x128xbf16, #tpu.memory_space<vmem>>) attributes {dimension_semantics = [#tpu.dimension_semantics<parallel>], iteration_bounds = array<i64: 1>, scalar_prefetch = 0 : i64, scratch_operands = 0 : i64, tpu.core_type = #tpu.core_type<tc>, window_params = [{transform_indices = @transform_0, window_bounds = array<i64: 16, 11>}, {pipeline_mode = #tpu.pipeline_mode<synchronous>, transform_indices = @transform_1, window_bounds = array<i64: 11, 512>}, {pipeline_mode = #tpu.pipeline_mode<synchronous>, transform_indices = @transform_2, window_bounds = array<i64: 1, 512>}, {pipeline_mode = #tpu.pipeline_mode<synchronous>, transform_indices = @transform_3, window_bounds = array<i64: 512, 512>}, {pipeline_mode = #tpu.pipeline_mode<synchronous>, transform_indices = @transform_4, window_bounds = array<i64: 1, 512>}, {pipeline_mode = #tpu.pipeline_mode<synchronous>, transform_indices = @transform_5, window_bounds = array<i64: 512, 128>}, {pipeline_mode = #tpu.pipeline_mode<synchronous>, transform_indices = @transform_6, window_bounds = array<i64: 1, 128>}, {transform_indices = @transform_7, window_bounds = array<i64: 16, 128>}]} {
    %c0 = arith.constant 0 : index
    %c0_0 = arith.constant 0 : index
    %0 = vector.load %arg1[%c0, %c0_0] : memref<16x11xbf16, #tpu.memory_space<vmem>>, vector<16x11xbf16>
    %c0_1 = arith.constant 0 : index
    %c0_2 = arith.constant 0 : index
    %1 = vector.load %arg2[%c0_1, %c0_2] : memref<11x512xbf16, #tpu.memory_space<vmem>>, vector<11x512xbf16>
    %cst = arith.constant dense<0.000000e+00> : vector<16x512xf32>
    %2 = tpu.matmul %0, %1, %cst {dimension_numbers = #tpu.dot_dimension_numbers<[1], [0], [0], [1], [0, 0, 1, 1], [], []>} : vector<16x11xbf16>, vector<11x512xbf16>, vector<16x512xf32> -> vector<16x512xf32>
    %c0_3 = arith.constant 0 : index
    %c0_4 = arith.constant 0 : index
    %3 = vector.load %arg3[%c0_3, %c0_4] : memref<1x512xf32, #tpu.memory_space<vmem>>, vector<1x512xf32>
    %4 = vector.broadcast %3 : vector<1x512xf32> to vector<16x512xf32>
    %5 = arith.addf %2, %4 : vector<16x512xf32>
    %cst_5 = arith.constant 0.000000e+00 : f32
    %6 = vector.broadcast %cst_5 : f32 to vector<16x512xf32>
    %7 = arith.maximumf %5, %6 : vector<16x512xf32>
    %8 = arith.truncf %7 : vector<16x512xf32> to vector<16x512xbf16>
    %c0_6 = arith.constant 0 : index
    %c0_7 = arith.constant 0 : index
    %9 = vector.load %arg4[%c0_6, %c0_7] : memref<512x512xbf16, #tpu.memory_space<vmem>>, vector<512x512xbf16>
    %cst_8 = arith.constant dense<0.000000e+00> : vector<16x512xf32>
    %10 = tpu.matmul %8, %9, %cst_8 {dimension_numbers = #tpu.dot_dimension_numbers<[1], [0], [0], [1], [0, 0, 1, 1], [], []>} : vector<16x512xbf16>, vector<512x512xbf16>, vector<16x512xf32> -> vector<16x512xf32>
    %c0_9 = arith.constant 0 : index
    %c0_10 = arith.constant 0 : index
    %11 = vector.load %arg5[%c0_9, %c0_10] : memref<1x512xf32, #tpu.memory_space<vmem>>, vector<1x512xf32>
    %12 = vector.broadcast %11 : vector<1x512xf32> to vector<16x512xf32>
    %13 = arith.addf %10, %12 : vector<16x512xf32>
    %cst_11 = arith.constant 0.000000e+00 : f32
    %14 = vector.broadcast %cst_11 : f32 to vector<16x512xf32>
    %15 = arith.maximumf %13, %14 : vector<16x512xf32>
    %16 = arith.truncf %15 : vector<16x512xf32> to vector<16x512xbf16>
    %c0_12 = arith.constant 0 : index
    %c0_13 = arith.constant 0 : index
    %17 = vector.load %arg6[%c0_12, %c0_13] : memref<512x128xbf16, #tpu.memory_space<vmem>>, vector<512x128xbf16>
    %cst_14 = arith.constant dense<0.000000e+00> : vector<16x128xf32>
    %18 = tpu.matmul %16, %17, %cst_14 {dimension_numbers = #tpu.dot_dimension_numbers<[1], [0], [0], [1], [0, 0, 1, 1], [], []>} : vector<16x512xbf16>, vector<512x128xbf16>, vector<16x128xf32> -> vector<16x128xf32>
    %c0_15 = arith.constant 0 : index
    %c0_16 = arith.constant 0 : index
    %19 = vector.load %arg7[%c0_15, %c0_16] : memref<1x128xf32, #tpu.memory_space<vmem>>, vector<1x128xf32>
    %20 = vector.broadcast %19 : vector<1x128xf32> to vector<16x128xf32>
    %21 = arith.addf %18, %20 : vector<16x128xf32>
    %cst_17 = arith.constant 0.000000e+00 : f32
    %22 = vector.broadcast %cst_17 : f32 to vector<16x128xf32>
    %23 = arith.subf %22, %21 : vector<16x128xf32>
    %24 = math.exp %23 : vector<16x128xf32>
    %cst_18 = arith.constant 1.000000e+00 : f32
    %25 = vector.broadcast %cst_18 : f32 to vector<16x128xf32>
    %26 = arith.addf %25, %24 : vector<16x128xf32>
    %27 = tpu.reciprocal %26 {approx = true} : vector<16x128xf32> -> vector<16x128xf32>
    %28 = arith.truncf %27 : vector<16x128xf32> to vector<16x128xbf16>
    %c0_19 = arith.constant 0 : index
    %c0_20 = arith.constant 0 : index
    %29 = vector.load %arg8[%c0_19, %c0_20] : memref<16x128xbf16, #tpu.memory_space<vmem>>, vector<16x128xbf16>
    tpu.vector_store %arg8[%c0_19, %c0_20], %28 {strides = array<i32>} : memref<16x128xbf16, #tpu.memory_space<vmem>>, vector<16x128xbf16>,
    return
  }
  func.func @transform_0(%arg0: i32) -> (i32, i32) {
    %c0_i32 = arith.constant 0 : i32
    %c0_i32_0 = arith.constant 0 : i32
    return %arg0, %c0_i32 : i32, i32
  }
  func.func @transform_1(%arg0: i32) -> (i32, i32) {
    %c0_i32 = arith.constant 0 : i32
    %c0_i32_0 = arith.constant 0 : i32
    %c0_i32_1 = arith.constant 0 : i32
    return %c0_i32, %c0_i32_0 : i32, i32
  }
  func.func @transform_2(%arg0: i32) -> (i32, i32) {
    %c0_i32 = arith.constant 0 : i32
    %c0_i32_0 = arith.constant 0 : i32
    %c0_i32_1 = arith.constant 0 : i32
    return %c0_i32, %c0_i32_0 : i32, i32
  }
  func.func @transform_3(%arg0: i32) -> (i32, i32) {
    %c0_i32 = arith.constant 0 : i32
    %c0_i32_0 = arith.constant 0 : i32
    %c0_i32_1 = arith.constant 0 : i32
    return %c0_i32, %c0_i32_0 : i32, i32
  }
  func.func @transform_4(%arg0: i32) -> (i32, i32) {
    %c0_i32 = arith.constant 0 : i32
    %c0_i32_0 = arith.constant 0 : i32
    %c0_i32_1 = arith.constant 0 : i32
    return %c0_i32, %c0_i32_0 : i32, i32
  }
  func.func @transform_5(%arg0: i32) -> (i32, i32) {
    %c0_i32 = arith.constant 0 : i32
    %c0_i32_0 = arith.constant 0 : i32
    %c0_i32_1 = arith.constant 0 : i32
    return %c0_i32, %c0_i32_0 : i32, i32
  }
  func.func @transform_6(%arg0: i32) -> (i32, i32) {
    %c0_i32 = arith.constant 0 : i32
    %c0_i32_0 = arith.constant 0 : i32
    %c0_i32_1 = arith.constant 0 : i32
    return %c0_i32, %c0_i32_0 : i32, i32
  }
  func.func @transform_7(%arg0: i32) -> (i32, i32) {
    %c0_i32 = arith.constant 0 : i32
    %c0_i32_0 = arith.constant 0 : i32
    return %arg0, %c0_i32 : i32, i32
  }
}

</mosaic_0001>

<llo_original>
// kernel: discriminator_forward.1
$region0: #{discriminator_forward.1}
  #allocation0 [shape = 'u32[]', space=smem, size = 0x4, offset = 0x4, fixed_abs, tag = 'smem constant byte address 0x4 - core index']
  #allocation1 [shape = 'u32[144,128]{1,0:T(1,128)}', space=vmem, size = 0x12000, scoped, tag = 'internal scratch']
  %s0 = inlined_call_operand.vmem [shape: bf16[16,11], index: 0, kind: input, shape index: {}]
  %s1 = inlined_call_operand.vmem [shape: bf16[11,512], index: 1, kind: input, shape index: {}]
  %s2 = inlined_call_operand.vmem [shape: f32[1,512], index: 2, kind: input, shape index: {}]
  %s3 = inlined_call_operand.hbm [shape: bf16[512,512], index: 3, kind: input, shape index: {}]
  %s4 = inlined_call_operand.vmem [shape: f32[1,512], index: 4, kind: input, shape index: {}]
  %s5 = inlined_call_operand.hbm [shape: bf16[512,128], index: 5, kind: input, shape index: {}]
  %s6 = inlined_call_operand.vmem [shape: f32[1,128], index: 6, kind: input, shape index: {}]
  %s7 = inlined_call_operand.vmem [shape: bf16[16,128], index: 7, kind: output, shape index: {}]
  %s8 = sld [smem:[#allocation0]]
  $region46: #{discriminator_forward.1} parent=0
    _
  %s10 = ssub.s32 1, %s8
  %s11 = scalar_select 0, %s10, %s8
  $region1: #{discriminator_forward.1} parent=0
    #allocation2 [shape = 'u8[524288]{0}', space=vmem, size = 0x80000, scoped, tag = 'input window, operand 3, single buffered']
    #allocation3 [shape = 's32[1]{0}', space=sflag, size = 0x4, scoped, tag = 'scoped memory for discriminator_forward.1']
    #allocation4 [shape = 'u8[131072]{0}', space=vmem, size = 0x20000, scoped, tag = 'input window, operand 5, single buffered']
    #allocation5 [shape = 's32[1]{0}', space=sflag, size = 0x4, scoped, tag = 'scoped memory for discriminator_forward.1']
    %12 = vsyncpa [#allocation3], 0
    %13 = vsyncpa [#allocation5], 0
    // Predicated region
    $region2: #{discriminator_forward.1} parent=1 // pred_check
      _
    $region3: #{discriminator_forward.1} parent=1 // pred_check_branch
      %15 = sbr.rel (0) target = $region5
    $region4: #{discriminator_forward.1} parent=1 // pred_region
      _
    $region5: #{discriminator_forward.1} parent=1 // pred_fallthru
      _
    // Predicated region
    $region6: #{discriminator_forward.1} parent=1 // pred_check
      _
    $region7: #{discriminator_forward.1} parent=1 // pred_check_branch
      %17 = sbr.rel (0) target = $region9
    $region8: #{discriminator_forward.1} parent=1 // pred_region
      _
    $region9: #{discriminator_forward.1} parent=1 // pred_fallthru
      _
    // Predicated region
    $region10: #{discriminator_forward.1} parent=1 // pred_check
      _
    $region11: #{discriminator_forward.1} parent=1 // pred_check_branch
      %19 = sbr.rel (0) target = $region13
    $region12: #{discriminator_forward.1} parent=1 // pred_region
      _
    $region13: #{discriminator_forward.1} parent=1 // pred_fallthru
      _
    // Predicated region
    $region14: #{discriminator_forward.1} parent=1 // pred_check
      _
    $region15: #{discriminator_forward.1} parent=1 // pred_check_branch
      %21 = sbr.rel (0) target = $region17
    $region16: #{discriminator_forward.1} parent=1 // pred_region
      %s23 = ssub.s32 16384, 16384
      %24 = vsyncadd [#allocation3], %s23
      %s25 = sshll.u32 [#allocation2], 4
      %s26 = int_to_ptr.vmem [resolvable:$true] %s25
      %31 = dma.hbm_to_vmem [thread:$0]  %s3, 16384, %s26, [#allocation3], 256, 256, 16
    $region17: #{discriminator_forward.1} parent=1 // pred_fallthru
      _
    // Predicated region
    $region18: #{discriminator_forward.1} parent=1 // pred_check
      _
    $region19: #{discriminator_forward.1} parent=1 // pred_check_branch
      %33 = sbr.rel (0) target = $region21
    $region20: #{discriminator_forward.1} parent=1 // pred_region
      _
    $region21: #{discriminator_forward.1} parent=1 // pred_fallthru
      _
    // Predicated region
    $region22: #{discriminator_forward.1} parent=1 // pred_check
      _
    $region23: #{discriminator_forward.1} parent=1 // pred_check_branch
      %35 = sbr.rel (0) target = $region25
    $region24: #{discriminator_forward.1} parent=1 // pred_region
      %s37 = ssub.s32 4096, 4096
      %38 = vsyncadd [#allocation5], %s37
      %s39 = sshll.u32 [#allocation4], 4
      %s40 = int_to_ptr.vmem [resolvable:$true] %s39
      %45 = dma.hbm_to_vmem [thread:$0]  %s5, 4096, %s40, [#allocation5], 64, 64, 4
    $region25: #{discriminator_forward.1} parent=1 // pred_fallthru
      _
    // Predicated region
    $region26: #{discriminator_forward.1} parent=1 // pred_check
      _
    $region27: #{discriminator_forward.1} parent=1 // pred_check_branch
      %47 = sbr.rel (0) target = $region29
    $region28: #{discriminator_forward.1} parent=1 // pred_region
      _
    $region29: #{discriminator_forward.1} parent=1 // pred_fallthru
      _
    // Predicated region
    $region30: #{discriminator_forward.1} parent=1 // pred_check
      _
    $region31: #{discriminator_forward.1} parent=1 // pred_check_branch
      %49 = sbr.rel (0) target = $region33
    $region32: #{discriminator_forward.1} parent=1 // pred_region
      %50 = dma.done [#allocation3], 16384
    $region33: #{discriminator_forward.1} parent=1 // pred_fallthru
      _
    // Predicated region
    $region34: #{discriminator_forward.1} parent=1 // pred_check
      _
    $region35: #{discriminator_forward.1} parent=1 // pred_check_branch
      %52 = sbr.rel (0) target = $region37
    $region36: #{discriminator_forward.1} parent=1 // pred_region
      %53 = dma.done [#allocation5], 4096
    $region37: #{discriminator_forward.1} parent=1 // pred_fallthru
      _
    %v55 = vld [vmem:[%s0] sm:$0xf]
    %v56 = vld [vmem:[%s0 + $0x4] sm:$0xf]
    %v57 = vld [vmem:[%s1] sm:$0xff]
    %v58 = vld [vmem:[%s1 + $0x8] sm:$0xff]
    %v59 = vld [vmem:[%s1 + $0x10] sm:$0x33]
    %v60 = vld [vmem:[%s1 + $0x18] sm:$0x33]
    %v61 = vld [vmem:[%s2] sm:$0xf]
    %v63 = vlaneseq
    %v64 = vshrl.u32 %v63, 7
    %v65 = vsub.s32 0, %v64
    %v66 = vrot.slane %v61, %v65
    %v67 = vlaneseq
    %v68 = vshrl.u32 %v67, 7
    %v69 = vsub.s32 1, %v68
    %v70 = vrot.slane %v61, %v69
    %v71 = vlaneseq
    %v72 = vshrl.u32 %v71, 7
    %v73 = vsub.s32 2, %v72
    %v74 = vrot.slane %v61, %v73
    %v75 = vlaneseq
    %v76 = vshrl.u32 %v75, 7
    %v77 = vsub.s32 3, %v76
    %v78 = vrot.slane %v61, %v77
    %v85 = vunpack.c.l.b16 %v55
    %v86 = vunpack.c.l.b16 %v56
    %v87 = vpack.c.b16 %v86, %v85
    %v92 = vunpack.c.l.b16 %v57
    %v93 = vunpack.c.h.b16 %v57
    %v94 = vunpack.c.l.b16 %v58
    %v95 = vunpack.c.h.b16 %v58
    %v96 = vunpack.c.l.b16 %v59
    %v97 = vunpack.c.h.b16 %v59
    %v98 = vunpack.c.l.b16 %v60
    %v99 = vunpack.c.h.b16 %v60
    %v100 = vpack.c.b16 %v96, %v92
    %v101 = vpack.c.b16 %v97, %v93
    %v102 = vpack.c.b16 %v98, %v94
    %v103 = vpack.c.b16 %v99, %v95
    %vm104 = vcmask 89088
    %v106 = vsel %vm104, %v87, 0
    %vm108 = vcmask 1044480
    %vm109 = vcmask 1045504
    %v110 = vsel %vm108, 4294967295, 65535
    %v111 = vsel %vm109, %v110, 0
    %v113 = vand.u32 %v100, %v111
    %v116 = vand.u32 %v101, %v111
    %v119 = vand.u32 %v102, %v111
    %v122 = vand.u32 %v103, %v111
    %124 = vmatprep.subr.bf16.mxu0 %v116
    %125 = vmatpush1.bf16.msra.mxu0 %v113
    %126 = vmatprep.subr.bf16.mxu0 0
    %127 = vmatpush1.bf16.msra.mxu0 0
    %128 = vmatprep.subr.bf16.mxu0 0
    %129 = vmatpush1.bf16.msra.mxu0 0
    %130 = vmatprep.subr.bf16.mxu0 0
    %131 = vmatpush1.bf16.msra.mxu0 0
    %132 = vmatprep.subr.bf16.mxu0 0
    %133 = vmatpush1.bf16.msra.mxu0 0
    %134 = vmatprep.subr.bf16.mxu0 0
    %135 = vmatpush1.bf16.msra.mxu0 0
    %136 = vmatprep.subr.bf16.mxu0 0
    %137 = vmatpush1.bf16.msra.mxu0 0
    %138 = vmatprep.subr.bf16.mxu0 0
    %139 = vmatpush1.bf16.msra.mxu0 0
    %140 = vmatprep.subr.bf16.mxu0 0
    %141 = vmatpush1.bf16.msra.mxu0 0
    %142 = vmatprep.subr.bf16.mxu0 0
    %143 = vmatpush1.bf16.msra.mxu0 0
    %144 = vmatprep.subr.bf16.mxu0 0
    %145 = vmatpush1.bf16.msra.mxu0 0
    %146 = vmatprep.subr.bf16.mxu0 0
    %147 = vmatpush1.bf16.msra.mxu0 0
    %148 = vmatprep.subr.bf16.mxu0 0
    %149 = vmatpush1.bf16.msra.mxu0 0
    %150 = vmatprep.subr.bf16.mxu0 0
    %151 = vmatpush1.bf16.msra.mxu0 0
    %152 = vmatprep.subr.bf16.mxu0 0
    %153 = vmatpush1.bf16.msra.mxu0 0
    %154 = vmatprep.subr.bf16.mxu0 0
    %155 = vmatpush1.bf16.msra.mxu0 0
    %156 = vmatprep.mubr.bf16.mxu0 0
    %157 = vmatmul.mubr.bf16.gmra.mrb[0].mxu0 %v106
    %v158 = vpop.f32.mrb[0].mxu0
    %v159 = vadd.f32 %v66, %v158
    %v160 = vpop.f32.mrb[0].mxu0
    %v161 = vadd.f32 %v70, %v160
    %v162 = vpop.f32.mrb[0].mxu0
    %v163 = vadd.f32 %v66, %v162
    %v164 = vpop.f32.mrb[0].mxu0
    %v165 = vadd.f32 %v70, %v164
    %166 = vdwg.mxu0
    %167 = vmatprep.subr.bf16.mxu0 %v122
    %168 = vmatpush1.bf16.msra.mxu0 %v119
    %169 = vmatprep.subr.bf16.mxu0 0
    %170 = vmatpush1.bf16.msra.mxu0 0
    %171 = vmatprep.subr.bf16.mxu0 0
    %172 = vmatpush1.bf16.msra.mxu0 0
    %173 = vmatprep.subr.bf16.mxu0 0
    %174 = vmatpush1.bf16.msra.mxu0 0
    %175 = vmatprep.subr.bf16.mxu0 0
    %176 = vmatpush1.bf16.msra.mxu0 0
    %177 = vmatprep.subr.bf16.mxu0 0
    %178 = vmatpush1.bf16.msra.mxu0 0
    %179 = vmatprep.subr.bf16.mxu0 0
    %180 = vmatpush1.bf16.msra.mxu0 0
    %181 = vmatprep.subr.bf16.mxu0 0
    %182 = vmatpush1.bf16.msra.mxu0 0
    %183 = vmatprep.subr.bf16.mxu0 0
    %184 = vmatpush1.bf16.msra.mxu0 0
    %185 = vmatprep.subr.bf16.mxu0 0
    %186 = vmatpush1.bf16.msra.mxu0 0
    %187 = vmatprep.subr.bf16.mxu0 0
    %188 = vmatpush1.bf16.msra.mxu0 0
    %189 = vmatprep.subr.bf16.mxu0 0
    %190 = vmatpush1.bf16.msra.mxu0 0
    %191 = vmatprep.subr.bf16.mxu0 0
    %192 = vmatpush1.bf16.msra.mxu0 0
    %193 = vmatprep.subr.bf16.mxu0 0
    %194 = vmatpush1.bf16.msra.mxu0 0
    %195 = vmatprep.subr.bf16.mxu0 0
    %196 = vmatpush1.bf16.msra.mxu0 0
    %197 = vmatprep.subr.bf16.mxu0 0
    %198 = vmatpush1.bf16.msra.mxu0 0
    %199 = vmatprep.mubr.bf16.mxu0 0
    %200 = vmatmul.mubr.bf16.gmra.mrb[0].mxu0 %v106
    %v201 = vpop.f32.mrb[0].mxu0
    %v202 = vadd.f32 %v74, %v201
    %v203 = vpop.f32.mrb[0].mxu0
    %v204 = vadd.f32 %v78, %v203
    %v205 = vpop.f32.mrb[0].mxu0
    %v206 = vadd.f32 %v74, %v205
    %v207 = vpop.f32.mrb[0].mxu0
    %v208 = vadd.f32 %v78, %v207
    %209 = vdwg.mxu0
    %v210 = vmax.f32 %v159, 0.0
    %v211 = vmax.f32 %v161, 0.0
    %v212 = vmax.f32 %v202, 0.0
    %v213 = vmax.f32 %v204, 0.0
    %v214 = vmax.f32 %v163, 0.0
    %v215 = vmax.f32 %v165, 0.0
    %v216 = vmax.f32 %v206, 0.0
    %v217 = vmax.f32 %v208, 0.0
    %v218 = vpack.c.bf16 %v214, %v210
    %v219 = vpack.c.bf16 %v215, %v211
    %v220 = vpack.c.bf16 %v216, %v212
    %v221 = vpack.c.bf16 %v217, %v213
    %v222 = vld [vmem:[#allocation2] sm:$0xff]
    %v223 = vld [vmem:[#allocation2 + $0x8] sm:$0xff]
    %v224 = vld [vmem:[#allocation2 + $0x10] sm:$0xff]
    %v225 = vld [vmem:[#allocation2 + $0x18] sm:$0xff]
    %v226 = vld [vmem:[#allocation2 + $0x20] sm:$0xff]
    %v227 = vld [vmem:[#allocation2 + $0x28] sm:$0xff]
    %v228 = vld [vmem:[#allocation2 + $0x30] sm:$0xff]
    %v229 = vld [vmem:[#allocation2 + $0x38] sm:$0xff]
    %v230 = vld [vmem:[#allocation2 + $0x40] sm:$0xff]
    %v231 = vld [vmem:[#allocation2 + $0x48] sm:$0xff]
    %v232 = vld [vmem:[#allocation2 + $0x50] sm:$0xff]
    %v233 = vld [vmem:[#allocation2 + $0x58] sm:$0xff]
    %v234 = vld [vmem:[#allocation2 + $0x60] sm:$0xff]
    %v235 = vld [vmem:[#allocation2 + $0x68] sm:$0xff]
    %v236 = vld [vmem:[#allocation2 + $0x70] sm:$0xff]
    %v237 = vld [vmem:[#allocation2 + $0x78] sm:$0xff]
    %v238 = vld [vmem:[#allocation2 + $0x80] sm:$0xff]
    %v239 = vld [vmem:[#allocation2 + $0x88] sm:$0xff]
    %v240 = vld [vmem:[#allocation2 + $0x90] sm:$0xff]
    %v241 = vld [vmem:[#allocation2 + $0x98] sm:$0xff]
    %v242 = vld [vmem:[#allocation2 + $0xa0] sm:$0xff]
    %v243 = vld [vmem:[#allocation2 + $0xa8] sm:$0xff]
    %v244 = vld [vmem:[#allocation2 + $0xb0] sm:$0xff]
    %v245 = vld [vmem:[#allocation2 + $0xb8] sm:$0xff]
    %v246 = vld [vmem:[#allocation2 + $0xc0] sm:$0xff]
    %v247 = vld [vmem:[#allocation2 + $0xc8] sm:$0xff]
    %v248 = vld [vmem:[#allocation2 + $0xd0] sm:$0xff]
    %v249 = vld [vmem:[#allocation2 + $0xd8] sm:$0xff]
    %v250 = vld [vmem:[#allocation2 + $0xe0] sm:$0xff]
    %v251 = vld [vmem:[#allocation2 + $0xe8] sm:$0xff]
    %v252 = vld [vmem:[#allocation2 + $0xf0] sm:$0xff]
    %v253 = vld [vmem:[#allocation2 + $0xf8] sm:$0xff]
    %v254 = vld [vmem:[#allocation2 + $0x100] sm:$0xff]
    %v255 = vld [vmem:[#allocation2 + $0x108] sm:$0xff]
    %v256 = vld [vmem:[#allocation2 + $0x110] sm:$0xff]
    %v257 = vld [vmem:[#allocation2 + $0x118] sm:$0xff]
    %v258 = vld [vmem:[#allocation2 + $0x120] sm:$0xff]
    %v259 = vld [vmem:[#allocation2 + $0x128] sm:$0xff]
    %v260 = vld [vmem:[#allocation2 + $0x130] sm:$0xff]
    %v261 = vld [vmem:[#allocation2 + $0x138] sm:$0xff]
    %v262 = vld [vmem:[#allocation2 + $0x140] sm:$0xff]
    %v263 = vld [vmem:[#allocation2 + $0x148] sm:$0xff]
    %v264 = vld [vmem:[#allocation2 + $0x150] sm:$0xff]
    %v265 = vld [vmem:[#allocation2 + $0x158] sm:$0xff]
    %v266 = vld [vmem:[#allocation2 + $0x160] sm:$0xff]
    %v267 = vld [vmem:[#allocation2 + $0x168] sm:$0xff]
    %v268 = vld [vmem:[#allocation2 + $0x170] sm:$0xff]
    %v269 = vld [vmem:[#allocation2 + $0x178] sm:$0xff]
    %v270 = vld [vmem:[#allocation2 + $0x180] sm:$0xff]
    %v271 = vld [vmem:[#allocation2 + $0x188] sm:$0xff]
    %v272 = vld [vmem:[#allocation2 + $0x190] sm:$0xff]
    %v273 = vld [vmem:[#allocation2 + $0x198] sm:$0xff]
    %v274 = vld [vmem:[#allocation2 + $0x1a0] sm:$0xff]
    %v275 = vld [vmem:[#allocation2 + $0x1a8] sm:$0xff]
    %v276 = vld [vmem:[#allocation2 + $0x1b0] sm:$0xff]
    %v277 = vld [vmem:[#allocation2 + $0x1b8] sm:$0xff]
    %v278 = vld [vmem:[#allocation2 + $0x1c0] sm:$0xff]
    %v279 = vld [vmem:[#allocation2 + $0x1c8] sm:$0xff]
    %v280 = vld [vmem:[#allocation2 + $0x1d0] sm:$0xff]
    %v281 = vld [vmem:[#allocation2 + $0x1d8] sm:$0xff]
    %v282 = vld [vmem:[#allocation2 + $0x1e0] sm:$0xff]
    %v283 = vld [vmem:[#allocation2 + $0x1e8] sm:$0xff]
    %v284 = vld [vmem:[#allocation2 + $0x1f0] sm:$0xff]
    %v285 = vld [vmem:[#allocation2 + $0x1f8] sm:$0xff]
    %v286 = vld [vmem:[#allocation2 + $0x200] sm:$0xff]
    %v287 = vld [vmem:[#allocation2 + $0x208] sm:$0xff]
    %v288 = vld [vmem:[#allocation2 + $0x210] sm:$0xff]
    %v289 = vld [vmem:[#allocation2 + $0x218] sm:$0xff]
    %v290 = vld [vmem:[#allocation2 + $0x220] sm:$0xff]
    %v291 = vld [vmem:[#allocation2 + $0x228] sm:$0xff]
    %v292 = vld [vmem:[#allocation2 + $0x230] sm:$0xff]
    %v293 = vld [vmem:[#allocation2 + $0x238] sm:$0xff]
    %v294 = vld [vmem:[#allocation2 + $0x240] sm:$0xff]
    %v295 = vld [vmem:[#allocation2 + $0x248] sm:$0xff]
    %v296 = vld [vmem:[#allocation2 + $0x250] sm:$0xff]
    %v297 = vld [vmem:[#allocation2 + $0x258] sm:$0xff]
    %v298 = vld [vmem:[#allocation2 + $0x260] sm:$0xff]
    %v299 = vld [vmem:[#allocation2 + $0x268] sm:$0xff]
    %v300 = vld [vmem:[#allocation2 + $0x270] sm:$0xff]
    %v301 = vld [vmem:[#allocation2 + $0x278] sm:$0xff]
    %v302 = vld [vmem:[#allocation2 + $0x280] sm:$0xff]
    %v303 = vld [vmem:[#allocation2 + $0x288] sm:$0xff]
    %v304 = vld [vmem:[#allocation2 + $0x290] sm:$0xff]
    %v305 = vld [vmem:[#allocation2 + $0x298] sm:$0xff]
    %v306 = vld [vmem:[#allocation2 + $0x2a0] sm:$0xff]
    %v307 = vld [vmem:[#allocation2 + $0x2a8] sm:$0xff]
    %v308 = vld [vmem:[#allocation2 + $0x2b0] sm:$0xff]
    %v309 = vld [vmem:[#allocation2 + $0x2b8] sm:$0xff]
    %v310 = vld [vmem:[#allocation2 + $0x2c0] sm:$0xff]
    %v311 = vld [vmem:[#allocation2 + $0x2c8] sm:$0xff]
    %v312 = vld [vmem:[#allocation2 + $0x2d0] sm:$0xff]
    %v313 = vld [vmem:[#allocation2 + $0x2d8] sm:$0xff]
    %v314 = vld [vmem:[#allocation2 + $0x2e0] sm:$0xff]
    %v315 = vld [vmem:[#allocation2 + $0x2e8] sm:$0xff]
    %v316 = vld [vmem:[#allocation2 + $0x2f0] sm:$0xff]
    %v317 = vld [vmem:[#allocation2 + $0x2f8] sm:$0xff]
    %v318 = vld [vmem:[#allocation2 + $0x300] sm:$0xff]
    %v319 = vld [vmem:[#allocation2 + $0x308] sm:$0xff]
    %v320 = vld [vmem:[#allocation2 + $0x310] sm:$0xff]
    %v321 = vld [vmem:[#allocation2 + $0x318] sm:$0xff]
    %v322 = vld [vmem:[#allocation2 + $0x320] sm:$0xff]
    %v323 = vld [vmem:[#allocation2 + $0x328] sm:$0xff]
    %v324 = vld [vmem:[#allocation2 + $0x330] sm:$0xff]
    %v325 = vld [vmem:[#allocation2 + $0x338] sm:$0xff]
    %v326 = vld [vmem:[#allocation2 + $0x340] sm:$0xff]
    %v327 = vld [vmem:[#allocation2 + $0x348] sm:$0xff]
    %v328 = vld [vmem:[#allocation2 + $0x350] sm:$0xff]
    %v329 = vld [vmem:[#allocation2 + $0x358] sm:$0xff]
    %v330 = vld [vmem:[#allocation2 + $0x360] sm:$0xff]
    %v331 = vld [vmem:[#allocation2 + $0x368] sm:$0xff]
    %v332 = vld [vmem:[#allocation2 + $0x370] sm:$0xff]
    %v333 = vld [vmem:[#allocation2 + $0x378] sm:$0xff]
    %v334 = vld [vmem:[#allocation2 + $0x380] sm:$0xff]
    %v335 = vld [vmem:[#allocation2 + $0x388] sm:$0xff]
    %v336 = vld [vmem:[#allocation2 + $0x390] sm:$0xff]
    %v337 = vld [vmem:[#allocation2 + $0x398] sm:$0xff]
    %v338 = vld [vmem:[#allocation2 + $0x3a0] sm:$0xff]
    %v339 = vld [vmem:[#allocation2 + $0x3a8] sm:$0xff]
    %v340 = vld [vmem:[#allocation2 + $0x3b0] sm:$0xff]
    %v341 = vld [vmem:[#allocation2 + $0x3b8] sm:$0xff]
    %v342 = vld [vmem:[#allocation2 + $0x3c0] sm:$0xff]
    %v343 = vld [vmem:[#allocation2 + $0x3c8] sm:$0xff]
    %v344 = vld [vmem:[#allocation2 + $0x3d0] sm:$0xff]
    %v345 = vld [vmem:[#allocation2 + $0x3d8] sm:$0xff]
    %v346 = vld [vmem:[#allocation2 + $0x3e0] sm:$0xff]
    %v347 = vld [vmem:[#allocation2 + $0x3e8] sm:$0xff]
    %v348 = vld [vmem:[#allocation2 + $0x3f0] sm:$0xff]
    %v349 = vld [vmem:[#allocation2 + $0x3f8] sm:$0xff]
    %v350 = vld [vmem:[%s4] sm:$0xf]
    %v352 = vlaneseq
    %v353 = vshrl.u32 %v352, 7
    %v354 = vsub.s32 0, %v353
    %v355 = vrot.slane %v350, %v354
    %v356 = vlaneseq
    %v357 = vshrl.u32 %v356, 7
    %v358 = vsub.s32 1, %v357
    %v359 = vrot.slane %v350, %v358
    %v360 = vlaneseq
    %v361 = vshrl.u32 %v360, 7
    %v362 = vsub.s32 2, %v361
    %v363 = vrot.slane %v350, %v362
    %v364 = vlaneseq
    %v365 = vshrl.u32 %v364, 7
    %v366 = vsub.s32 3, %v365
    %v367 = vrot.slane %v350, %v366
    %v500 = vunpack.c.l.b16 %v222
    %v501 = vunpack.c.h.b16 %v222
    %v502 = vunpack.c.l.b16 %v223
    %v503 = vunpack.c.h.b16 %v223
    %v504 = vunpack.c.l.b16 %v224
    %v505 = vunpack.c.h.b16 %v224
    %v506 = vunpack.c.l.b16 %v225
    %v507 = vunpack.c.h.b16 %v225
    %v508 = vunpack.c.l.b16 %v226
    %v509 = vunpack.c.h.b16 %v226
    %v510 = vunpack.c.l.b16 %v227
    %v511 = vunpack.c.h.b16 %v227
    %v512 = vunpack.c.l.b16 %v228
    %v513 = vunpack.c.h.b16 %v228
    %v514 = vunpack.c.l.b16 %v229
    %v515 = vunpack.c.h.b16 %v229
    %v516 = vunpack.c.l.b16 %v230
    %v517 = vunpack.c.h.b16 %v230
    %v518 = vunpack.c.l.b16 %v231
    %v519 = vunpack.c.h.b16 %v231
    %v520 = vunpack.c.l.b16 %v232
    %v521 = vunpack.c.h.b16 %v232
    %v522 = vunpack.c.l.b16 %v233
    %v523 = vunpack.c.h.b16 %v233
    %v524 = vunpack.c.l.b16 %v234
    %v525 = vunpack.c.h.b16 %v234
    %v526 = vunpack.c.l.b16 %v235
    %v527 = vunpack.c.h.b16 %v235
    %v528 = vunpack.c.l.b16 %v236
    %v529 = vunpack.c.h.b16 %v236
    %v530 = vunpack.c.l.b16 %v237
    %v531 = vunpack.c.h.b16 %v237
    %v532 = vunpack.c.l.b16 %v238
    %v533 = vunpack.c.h.b16 %v238
    %v534 = vunpack.c.l.b16 %v239
    %v535 = vunpack.c.h.b16 %v239
    %v536 = vunpack.c.l.b16 %v240
    %v537 = vunpack.c.h.b16 %v240
    %v538 = vunpack.c.l.b16 %v241
    %v539 = vunpack.c.h.b16 %v241
    %v540 = vunpack.c.l.b16 %v242
    %v541 = vunpack.c.h.b16 %v242
    %v542 = vunpack.c.l.b16 %v243
    %v543 = vunpack.c.h.b16 %v243
    %v544 = vunpack.c.l.b16 %v244
    %v545 = vunpack.c.h.b16 %v244
    %v546 = vunpack.c.l.b16 %v245
    %v547 = vunpack.c.h.b16 %v245
    %v548 = vunpack.c.l.b16 %v246
    %v549 = vunpack.c.h.b16 %v246
    %v550 = vunpack.c.l.b16 %v247
    %v551 = vunpack.c.h.b16 %v247
    %v552 = vunpack.c.l.b16 %v248
    %v553 = vunpack.c.h.b16 %v248
    %v554 = vunpack.c.l.b16 %v249
    %v555 = vunpack.c.h.b16 %v249
    %v556 = vunpack.c.l.b16 %v250
    %v557 = vunpack.c.h.b16 %v250
    %v558 = vunpack.c.l.b16 %v251
    %v559 = vunpack.c.h.b16 %v251
    %v560 = vunpack.c.l.b16 %v252
    %v561 = vunpack.c.h.b16 %v252
    %v562 = vunpack.c.l.b16 %v253
    %v563 = vunpack.c.h.b16 %v253
    %v564 = vunpack.c.l.b16 %v254
    %v565 = vunpack.c.h.b16 %v254
    %v566 = vunpack.c.l.b16 %v255
    %v567 = vunpack.c.h.b16 %v255
    %v568 = vunpack.c.l.b16 %v256
    %v569 = vunpack.c.h.b16 %v256
    %v570 = vunpack.c.l.b16 %v257
    %v571 = vunpack.c.h.b16 %v257
    %v572 = vunpack.c.l.b16 %v258
    %v573 = vunpack.c.h.b16 %v258
    %v574 = vunpack.c.l.b16 %v259
    %v575 = vunpack.c.h.b16 %v259
    %v576 = vunpack.c.l.b16 %v260
    %v577 = vunpack.c.h.b16 %v260
    %v578 = vunpack.c.l.b16 %v261
    %v579 = vunpack.c.h.b16 %v261
    %v580 = vunpack.c.l.b16 %v262
    %v581 = vunpack.c.h.b16 %v262
    %v582 = vunpack.c.l.b16 %v263
    %v583 = vunpack.c.h.b16 %v263
    %v584 = vunpack.c.l.b16 %v264
    %v585 = vunpack.c.h.b16 %v264
    %v586 = vunpack.c.l.b16 %v265
    %v587 = vunpack.c.h.b16 %v265
    %v588 = vunpack.c.l.b16 %v266
    %v589 = vunpack.c.h.b16 %v266
    %v590 = vunpack.c.l.b16 %v267
    %v591 = vunpack.c.h.b16 %v267
    %v592 = vunpack.c.l.b16 %v268
    %v593 = vunpack.c.h.b16 %v268
    %v594 = vunpack.c.l.b16 %v269
    %v595 = vunpack.c.h.b16 %v269
    %v596 = vunpack.c.l.b16 %v270
    %v597 = vunpack.c.h.b16 %v270
    %v598 = vunpack.c.l.b16 %v271
    %v599 = vunpack.c.h.b16 %v271
    %v600 = vunpack.c.l.b16 %v272
    %v601 = vunpack.c.h.b16 %v272
    %v602 = vunpack.c.l.b16 %v273
    %v603 = vunpack.c.h.b16 %v273
    %v604 = vunpack.c.l.b16 %v274
    %v605 = vunpack.c.h.b16 %v274
    %v606 = vunpack.c.l.b16 %v275
    %v607 = vunpack.c.h.b16 %v275
    %v608 = vunpack.c.l.b16 %v276
    %v609 = vunpack.c.h.b16 %v276
    %v610 = vunpack.c.l.b16 %v277
    %v611 = vunpack.c.h.b16 %v277
    %v612 = vunpack.c.l.b16 %v278
    %v613 = vunpack.c.h.b16 %v278
    %v614 = vunpack.c.l.b16 %v279
    %v615 = vunpack.c.h.b16 %v279
    %v616 = vunpack.c.l.b16 %v280
    %v617 = vunpack.c.h.b16 %v280
    %v618 = vunpack.c.l.b16 %v281
    %v619 = vunpack.c.h.b16 %v281
    %v620 = vunpack.c.l.b16 %v282
    %v621 = vunpack.c.h.b16 %v282
    %v622 = vunpack.c.l.b16 %v283
    %v623 = vunpack.c.h.b16 %v283
    %v624 = vunpack.c.l.b16 %v284
    %v625 = vunpack.c.h.b16 %v284
    %v626 = vunpack.c.l.b16 %v285
    %v627 = vunpack.c.h.b16 %v285
    %v628 = vunpack.c.l.b16 %v286
    %v629 = vunpack.c.h.b16 %v286
    %v630 = vunpack.c.l.b16 %v287
    %v631 = vunpack.c.h.b16 %v287
    %v632 = vunpack.c.l.b16 %v288
    %v633 = vunpack.c.h.b16 %v288
    %v634 = vunpack.c.l.b16 %v289
    %v635 = vunpack.c.h.b16 %v289
    %v636 = vunpack.c.l.b16 %v290
    %v637 = vunpack.c.h.b16 %v290
    %v638 = vunpack.c.l.b16 %v291
    %v639 = vunpack.c.h.b16 %v291
    %v640 = vunpack.c.l.b16 %v292
    %v641 = vunpack.c.h.b16 %v292
    %v642 = vunpack.c.l.b16 %v293
    %v643 = vunpack.c.h.b16 %v293
    %v644 = vunpack.c.l.b16 %v294
    %v645 = vunpack.c.h.b16 %v294
    %v646 = vunpack.c.l.b16 %v295
    %v647 = vunpack.c.h.b16 %v295
    %v648 = vunpack.c.l.b16 %v296
    %v649 = vunpack.c.h.b16 %v296
    %v650 = vunpack.c.l.b16 %v297
    %v651 = vunpack.c.h.b16 %v297
    %v652 = vunpack.c.l.b16 %v298
    %v653 = vunpack.c.h.b16 %v298
    %v654 = vunpack.c.l.b16 %v299
    %v655 = vunpack.c.h.b16 %v299
    %v656 = vunpack.c.l.b16 %v300
    %v657 = vunpack.c.h.b16 %v300
    %v658 = vunpack.c.l.b16 %v301
    %v659 = vunpack.c.h.b16 %v301
    %v660 = vunpack.c.l.b16 %v302
    %v661 = vunpack.c.h.b16 %v302
    %v662 = vunpack.c.l.b16 %v303
    %v663 = vunpack.c.h.b16 %v303
    %v664 = vunpack.c.l.b16 %v304
    %v665 = vunpack.c.h.b16 %v304
    %v666 = vunpack.c.l.b16 %v305
    %v667 = vunpack.c.h.b16 %v305
    %v668 = vunpack.c.l.b16 %v306
    %v669 = vunpack.c.h.b16 %v306
    %v670 = vunpack.c.l.b16 %v307
    %v671 = vunpack.c.h.b16 %v307
    %v672 = vunpack.c.l.b16 %v308
    %v673 = vunpack.c.h.b16 %v308
    %v674 = vunpack.c.l.b16 %v309
    %v675 = vunpack.c.h.b16 %v309
    %v676 = vunpack.c.l.b16 %v310
    %v677 = vunpack.c.h.b16 %v310
    %v678 = vunpack.c.l.b16 %v311
    %v679 = vunpack.c.h.b16 %v311
    %v680 = vunpack.c.l.b16 %v312
    %v681 = vunpack.c.h.b16 %v312
    %v682 = vunpack.c.l.b16 %v313
    %v683 = vunpack.c.h.b16 %v313
    %v684 = vunpack.c.l.b16 %v314
    %v685 = vunpack.c.h.b16 %v314
    %v686 = vunpack.c.l.b16 %v315
    %v687 = vunpack.c.h.b16 %v315
    %v688 = vunpack.c.l.b16 %v316
    %v689 = vunpack.c.h.b16 %v316
    %v690 = vunpack.c.l.b16 %v317
    %v691 = vunpack.c.h.b16 %v317
    %v692 = vunpack.c.l.b16 %v318
    %v693 = vunpack.c.h.b16 %v318
    %v694 = vunpack.c.l.b16 %v319
    %v695 = vunpack.c.h.b16 %v319
    %v696 = vunpack.c.l.b16 %v320
    %v697 = vunpack.c.h.b16 %v320
    %v698 = vunpack.c.l.b16 %v321
    %v699 = vunpack.c.h.b16 %v321
    %v700 = vunpack.c.l.b16 %v322
    %v701 = vunpack.c.h.b16 %v322
    %v702 = vunpack.c.l.b16 %v323
    %v703 = vunpack.c.h.b16 %v323
    %v704 = vunpack.c.l.b16 %v324
    %v705 = vunpack.c.h.b16 %v324
    %v706 = vunpack.c.l.b16 %v325
    %v707 = vunpack.c.h.b16 %v325
    %v708 = vunpack.c.l.b16 %v326
    %v709 = vunpack.c.h.b16 %v326
    %v710 = vunpack.c.l.b16 %v327
    %v711 = vunpack.c.h.b16 %v327
    %v712 = vunpack.c.l.b16 %v328
    %v713 = vunpack.c.h.b16 %v328
    %v714 = vunpack.c.l.b16 %v329
    %v715 = vunpack.c.h.b16 %v329
    %v716 = vunpack.c.l.b16 %v330
    %v717 = vunpack.c.h.b16 %v330
    %v718 = vunpack.c.l.b16 %v331
    %v719 = vunpack.c.h.b16 %v331
    %v720 = vunpack.c.l.b16 %v332
    %v721 = vunpack.c.h.b16 %v332
    %v722 = vunpack.c.l.b16 %v333
    %v723 = vunpack.c.h.b16 %v333
    %v724 = vunpack.c.l.b16 %v334
    %v725 = vunpack.c.h.b16 %v334
    %v726 = vunpack.c.l.b16 %v335
    %v727 = vunpack.c.h.b16 %v335
    %v728 = vunpack.c.l.b16 %v336
    %v729 = vunpack.c.h.b16 %v336
    %v730 = vunpack.c.l.b16 %v337
    %v731 = vunpack.c.h.b16 %v337
    %v732 = vunpack.c.l.b16 %v338
    %v733 = vunpack.c.h.b16 %v338
    %v734 = vunpack.c.l.b16 %v339
    %v735 = vunpack.c.h.b16 %v339
    %v736 = vunpack.c.l.b16 %v340
    %v737 = vunpack.c.h.b16 %v340
    %v738 = vunpack.c.l.b16 %v341
    %v739 = vunpack.c.h.b16 %v341
    %v740 = vunpack.c.l.b16 %v342
    %v741 = vunpack.c.h.b16 %v342
    %v742 = vunpack.c.l.b16 %v343
    %v743 = vunpack.c.h.b16 %v343
    %v744 = vunpack.c.l.b16 %v344
    %v745 = vunpack.c.h.b16 %v344
    %v746 = vunpack.c.l.b16 %v345
    %v747 = vunpack.c.h.b16 %v345
    %v748 = vunpack.c.l.b16 %v346
    %v749 = vunpack.c.h.b16 %v346
    %v750 = vunpack.c.l.b16 %v347
    %v751 = vunpack.c.h.b16 %v347
    %v752 = vunpack.c.l.b16 %v348
    %v753 = vunpack.c.h.b16 %v348
    %v754 = vunpack.c.l.b16 %v349
    %v755 = vunpack.c.h.b16 %v349
    %v756 = vpack.c.b16 %v504, %v500
    %v757 = vpack.c.b16 %v505, %v501
    %v758 = vpack.c.b16 %v506, %v502
    %v759 = vpack.c.b16 %v507, %v503
    %v760 = vpack.c.b16 %v512, %v508
    %v761 = vpack.c.b16 %v513, %v509
    %v762 = vpack.c.b16 %v514, %v510
    %v763 = vpack.c.b16 %v515, %v511
    %v764 = vpack.c.b16 %v520, %v516
    %v765 = vpack.c.b16 %v521, %v517
    %v766 = vpack.c.b16 %v522, %v518
    %v767 = vpack.c.b16 %v523, %v519
    %v768 = vpack.c.b16 %v528, %v524
    %v769 = vpack.c.b16 %v529, %v525
    %v770 = vpack.c.b16 %v530, %v526
    %v771 = vpack.c.b16 %v531, %v527
    %v772 = vpack.c.b16 %v536, %v532
    %v773 = vpack.c.b16 %v537, %v533
    %v774 = vpack.c.b16 %v538, %v534
    %v775 = vpack.c.b16 %v539, %v535
    %v776 = vpack.c.b16 %v544, %v540
    %v777 = vpack.c.b16 %v545, %v541
    %v778 = vpack.c.b16 %v546, %v542
    %v779 = vpack.c.b16 %v547, %v543
    %v780 = vpack.c.b16 %v552, %v548
    %v781 = vpack.c.b16 %v553, %v549
    %v782 = vpack.c.b16 %v554, %v550
    %v783 = vpack.c.b16 %v555, %v551
    %v784 = vpack.c.b16 %v560, %v556
    %v785 = vpack.c.b16 %v561, %v557
    %v786 = vpack.c.b16 %v562, %v558
    %v787 = vpack.c.b16 %v563, %v559
    %v788 = vpack.c.b16 %v568, %v564
    %v789 = vpack.c.b16 %v569, %v565
    %v790 = vpack.c.b16 %v570, %v566
    %v791 = vpack.c.b16 %v571, %v567
    %v792 = vpack.c.b16 %v576, %v572
    %v793 = vpack.c.b16 %v577, %v573
    %v794 = vpack.c.b16 %v578, %v574
    %v795 = vpack.c.b16 %v579, %v575
    %v796 = vpack.c.b16 %v584, %v580
    %v797 = vpack.c.b16 %v585, %v581
    %v798 = vpack.c.b16 %v586, %v582
    %v799 = vpack.c.b16 %v587, %v583
    %v800 = vpack.c.b16 %v592, %v588
    %v801 = vpack.c.b16 %v593, %v589
    %v802 = vpack.c.b16 %v594, %v590
    %v803 = vpack.c.b16 %v595, %v591
    %v804 = vpack.c.b16 %v600, %v596
    %v805 = vpack.c.b16 %v601, %v597
    %v806 = vpack.c.b16 %v602, %v598
    %v807 = vpack.c.b16 %v603, %v599
    %v808 = vpack.c.b16 %v608, %v604
    %v809 = vpack.c.b16 %v609, %v605
    %v810 = vpack.c.b16 %v610, %v606
    %v811 = vpack.c.b16 %v611, %v607
    %v812 = vpack.c.b16 %v616, %v612
    %v813 = vpack.c.b16 %v617, %v613
    %v814 = vpack.c.b16 %v618, %v614
    %v815 = vpack.c.b16 %v619, %v615
    %v816 = vpack.c.b16 %v624, %v620
    %v817 = vpack.c.b16 %v625, %v621
    %v818 = vpack.c.b16 %v626, %v622
    %v819 = vpack.c.b16 %v627, %v623
    %v820 = vpack.c.b16 %v632, %v628
    %v821 = vpack.c.b16 %v633, %v629
    %v822 = vpack.c.b16 %v634, %v630
    %v823 = vpack.c.b16 %v635, %v631
    %v824 = vpack.c.b16 %v640, %v636
    %v825 = vpack.c.b16 %v641, %v637
    %v826 = vpack.c.b16 %v642, %v638
    %v827 = vpack.c.b16 %v643, %v639
    %v828 = vpack.c.b16 %v648, %v644
    %v829 = vpack.c.b16 %v649, %v645
    %v830 = vpack.c.b16 %v650, %v646
    %v831 = vpack.c.b16 %v651, %v647
    %v832 = vpack.c.b16 %v656, %v652
    %v833 = vpack.c.b16 %v657, %v653
    %v834 = vpack.c.b16 %v658, %v654
    %v835 = vpack.c.b16 %v659, %v655
    %v836 = vpack.c.b16 %v664, %v660
    %v837 = vpack.c.b16 %v665, %v661
    %v838 = vpack.c.b16 %v666, %v662
    %v839 = vpack.c.b16 %v667, %v663
    %v840 = vpack.c.b16 %v672, %v668
    %v841 = vpack.c.b16 %v673, %v669
    %v842 = vpack.c.b16 %v674, %v670
    %v843 = vpack.c.b16 %v675, %v671
    %v844 = vpack.c.b16 %v680, %v676
    %v845 = vpack.c.b16 %v681, %v677
    %v846 = vpack.c.b16 %v682, %v678
    %v847 = vpack.c.b16 %v683, %v679
    %v848 = vpack.c.b16 %v688, %v684
    %v849 = vpack.c.b16 %v689, %v685
    %v850 = vpack.c.b16 %v690, %v686
    %v851 = vpack.c.b16 %v691, %v687
    %v852 = vpack.c.b16 %v696, %v692
    %v853 = vpack.c.b16 %v697, %v693
    %v854 = vpack.c.b16 %v698, %v694
    %v855 = vpack.c.b16 %v699, %v695
    %v856 = vpack.c.b16 %v704, %v700
    %v857 = vpack.c.b16 %v705, %v701
    %v858 = vpack.c.b16 %v706, %v702
    %v859 = vpack.c.b16 %v707, %v703
    %v860 = vpack.c.b16 %v712, %v708
    %v861 = vpack.c.b16 %v713, %v709
    %v862 = vpack.c.b16 %v714, %v710
    %v863 = vpack.c.b16 %v715, %v711
    %v864 = vpack.c.b16 %v720, %v716
    %v865 = vpack.c.b16 %v721, %v717
    %v866 = vpack.c.b16 %v722, %v718
    %v867 = vpack.c.b16 %v723, %v719
    %v868 = vpack.c.b16 %v728, %v724
    %v869 = vpack.c.b16 %v729, %v725
    %v870 = vpack.c.b16 %v730, %v726
    %v871 = vpack.c.b16 %v731, %v727
    %v872 = vpack.c.b16 %v736, %v732
    %v873 = vpack.c.b16 %v737, %v733
    %v874 = vpack.c.b16 %v738, %v734
    %v875 = vpack.c.b16 %v739, %v735
    %v876 = vpack.c.b16 %v744, %v740
    %v877 = vpack.c.b16 %v745, %v741
    %v878 = vpack.c.b16 %v746, %v742
    %v879 = vpack.c.b16 %v747, %v743
    %v880 = vpack.c.b16 %v752, %v748
    %v881 = vpack.c.b16 %v753, %v749
    %v882 = vpack.c.b16 %v754, %v750
    %v883 = vpack.c.b16 %v755, %v751
    %1012 = vmatprep.subr.bf16.mxu0 %v757
    %1013 = vmatpush1.bf16.msra.mxu0 %v756
    %1014 = vmatprep.subr.bf16.mxu0 %v761
    %1015 = vmatpush1.bf16.msra.mxu0 %v760
    %1016 = vmatprep.subr.bf16.mxu0 %v765
    %1017 = vmatpush1.bf16.msra.mxu0 %v764
    %1018 = vmatprep.subr.bf16.mxu0 %v769
    %1019 = vmatpush1.bf16.msra.mxu0 %v768
    %1020 = vmatprep.subr.bf16.mxu0 %v773
    %1021 = vmatpush1.bf16.msra.mxu0 %v772
    %1022 = vmatprep.subr.bf16.mxu0 %v777
    %1023 = vmatpush1.bf16.msra.mxu0 %v776
    %1024 = vmatprep.subr.bf16.mxu0 %v781
    %1025 = vmatpush1.bf16.msra.mxu0 %v780
    %1026 = vmatprep.subr.bf16.mxu0 %v785
    %1027 = vmatpush1.bf16.msra.mxu0 %v784
    %1028 = vmatprep.subr.bf16.mxu0 %v789
    %1029 = vmatpush1.bf16.msra.mxu0 %v788
    %1030 = vmatprep.subr.bf16.mxu0 %v793
    %1031 = vmatpush1.bf16.msra.mxu0 %v792
    %1032 = vmatprep.subr.bf16.mxu0 %v797
    %1033 = vmatpush1.bf16.msra.mxu0 %v796
    %1034 = vmatprep.subr.bf16.mxu0 %v801
    %1035 = vmatpush1.bf16.msra.mxu0 %v800
    %1036 = vmatprep.subr.bf16.mxu0 %v805
    %1037 = vmatpush1.bf16.msra.mxu0 %v804
    %1038 = vmatprep.subr.bf16.mxu0 %v809
    %1039 = vmatpush1.bf16.msra.mxu0 %v808
    %1040 = vmatprep.subr.bf16.mxu0 %v813
    %1041 = vmatpush1.bf16.msra.mxu0 %v812
    %1042 = vmatprep.subr.bf16.mxu0 %v817
    %1043 = vmatpush1.bf16.msra.mxu0 %v816
    %1044 = vmatprep.mubr.bf16.mxu0 %v219
    %1045 = vmatmul.mubr.bf16.gmra.mrb[0].mxu0 %v218
    %v1046 = vpop.f32.mrb[0].mxu0
    %v1047 = vadd.f32 %v355, %v1046
    %v1048 = vpop.f32.mrb[0].mxu0
    %v1049 = vadd.f32 %v359, %v1048
    %v1050 = vpop.f32.mrb[0].mxu0
    %v1051 = vadd.f32 %v355, %v1050
    %v1052 = vpop.f32.mrb[0].mxu0
    %v1053 = vadd.f32 %v359, %v1052
    %1054 = vdwg.mxu0
    %1055 = vmatprep.subr.bf16.mxu0 %v821
    %1056 = vmatpush1.bf16.msra.mxu0 %v820
    %1057 = vmatprep.subr.bf16.mxu0 %v825
    %1058 = vmatpush1.bf16.msra.mxu0 %v824
    %1059 = vmatprep.subr.bf16.mxu0 %v829
    %1060 = vmatpush1.bf16.msra.mxu0 %v828
    %1061 = vmatprep.subr.bf16.mxu0 %v833
    %1062 = vmatpush1.bf16.msra.mxu0 %v832
    %1063 = vmatprep.subr.bf16.mxu0 %v837
    %1064 = vmatpush1.bf16.msra.mxu0 %v836
    %1065 = vmatprep.subr.bf16.mxu0 %v841
    %1066 = vmatpush1.bf16.msra.mxu0 %v840
    %1067 = vmatprep.subr.bf16.mxu0 %v845
    %1068 = vmatpush1.bf16.msra.mxu0 %v844
    %1069 = vmatprep.subr.bf16.mxu0 %v849
    %1070 = vmatpush1.bf16.msra.mxu0 %v848
    %1071 = vmatprep.subr.bf16.mxu0 %v853
    %1072 = vmatpush1.bf16.msra.mxu0 %v852
    %1073 = vmatprep.subr.bf16.mxu0 %v857
    %1074 = vmatpush1.bf16.msra.mxu0 %v856
    %1075 = vmatprep.subr.bf16.mxu0 %v861
    %1076 = vmatpush1.bf16.msra.mxu0 %v860
    %1077 = vmatprep.subr.bf16.mxu0 %v865
    %1078 = vmatpush1.bf16.msra.mxu0 %v864
    %1079 = vmatprep.subr.bf16.mxu0 %v869
    %1080 = vmatpush1.bf16.msra.mxu0 %v868
    %1081 = vmatprep.subr.bf16.mxu0 %v873
    %1082 = vmatpush1.bf16.msra.mxu0 %v872
    %1083 = vmatprep.subr.bf16.mxu0 %v877
    %1084 = vmatpush1.bf16.msra.mxu0 %v876
    %1085 = vmatprep.subr.bf16.mxu0 %v881
    %1086 = vmatpush1.bf16.msra.mxu0 %v880
    %1087 = vmatprep.mubr.bf16.mxu0 %v221
    %1088 = vmatmul.mubr.bf16.gmra.mrb[0].mxu0 %v220
    %v1089 = vpop.f32.mrb[0].mxu0
    %v1090 = vadd.f32 %v1047, %v1089
    %v1091 = vpop.f32.mrb[0].mxu0
    %v1092 = vadd.f32 %v1049, %v1091
    %v1093 = vpop.f32.mrb[0].mxu0
    %v1094 = vadd.f32 %v1051, %v1093
    %v1095 = vpop.f32.mrb[0].mxu0
    %v1096 = vadd.f32 %v1053, %v1095
    %1097 = vdwg.mxu0
    %1098 = vmatprep.subr.bf16.mxu0 %v759
    %1099 = vmatpush1.bf16.msra.mxu0 %v758
    %1100 = vmatprep.subr.bf16.mxu0 %v763
    %1101 = vmatpush1.bf16.msra.mxu0 %v762
    %1102 = vmatprep.subr.bf16.mxu0 %v767
    %1103 = vmatpush1.bf16.msra.mxu0 %v766
    %1104 = vmatprep.subr.bf16.mxu0 %v771
    %1105 = vmatpush1.bf16.msra.mxu0 %v770
    %1106 = vmatprep.subr.bf16.mxu0 %v775
    %1107 = vmatpush1.bf16.msra.mxu0 %v774
    %1108 = vmatprep.subr.bf16.mxu0 %v779
    %1109 = vmatpush1.bf16.msra.mxu0 %v778
    %1110 = vmatprep.subr.bf16.mxu0 %v783
    %1111 = vmatpush1.bf16.msra.mxu0 %v782
    %1112 = vmatprep.subr.bf16.mxu0 %v787
    %1113 = vmatpush1.bf16.msra.mxu0 %v786
    %1114 = vmatprep.subr.bf16.mxu0 %v791
    %1115 = vmatpush1.bf16.msra.mxu0 %v790
    %1116 = vmatprep.subr.bf16.mxu0 %v795
    %1117 = vmatpush1.bf16.msra.mxu0 %v794
    %1118 = vmatprep.subr.bf16.mxu0 %v799
    %1119 = vmatpush1.bf16.msra.mxu0 %v798
    %1120 = vmatprep.subr.bf16.mxu0 %v803
    %1121 = vmatpush1.bf16.msra.mxu0 %v802
    %1122 = vmatprep.subr.bf16.mxu0 %v807
    %1123 = vmatpush1.bf16.msra.mxu0 %v806
    %1124 = vmatprep.subr.bf16.mxu0 %v811
    %1125 = vmatpush1.bf16.msra.mxu0 %v810
    %1126 = vmatprep.subr.bf16.mxu0 %v815
    %1127 = vmatpush1.bf16.msra.mxu0 %v814
    %1128 = vmatprep.subr.bf16.mxu0 %v819
    %1129 = vmatpush1.bf16.msra.mxu0 %v818
    %1130 = vmatprep.mubr.bf16.mxu0 %v219
    %1131 = vmatmul.mubr.bf16.gmra.mrb[0].mxu0 %v218
    %v1132 = vpop.f32.mrb[0].mxu0
    %v1133 = vadd.f32 %v363, %v1132
    %v1134 = vpop.f32.mrb[0].mxu0
    %v1135 = vadd.f32 %v367, %v1134
    %v1136 = vpop.f32.mrb[0].mxu0
    %v1137 = vadd.f32 %v363, %v1136
    %v1138 = vpop.f32.mrb[0].mxu0
    %v1139 = vadd.f32 %v367, %v1138
    %1140 = vdwg.mxu0
    %1141 = vmatprep.subr.bf16.mxu0 %v823
    %1142 = vmatpush1.bf16.msra.mxu0 %v822
    %1143 = vmatprep.subr.bf16.mxu0 %v827
    %1144 = vmatpush1.bf16.msra.mxu0 %v826
    %1145 = vmatprep.subr.bf16.mxu0 %v831
    %1146 = vmatpush1.bf16.msra.mxu0 %v830
    %1147 = vmatprep.subr.bf16.mxu0 %v835
    %1148 = vmatpush1.bf16.msra.mxu0 %v834
    %1149 = vmatprep.subr.bf16.mxu0 %v839
    %1150 = vmatpush1.bf16.msra.mxu0 %v838
    %1151 = vmatprep.subr.bf16.mxu0 %v843
    %1152 = vmatpush1.bf16.msra.mxu0 %v842
    %1153 = vmatprep.subr.bf16.mxu0 %v847
    %1154 = vmatpush1.bf16.msra.mxu0 %v846
    %1155 = vmatprep.subr.bf16.mxu0 %v851
    %1156 = vmatpush1.bf16.msra.mxu0 %v850
    %1157 = vmatprep.subr.bf16.mxu0 %v855
    %1158 = vmatpush1.bf16.msra.mxu0 %v854
    %1159 = vmatprep.subr.bf16.mxu0 %v859
    %1160 = vmatpush1.bf16.msra.mxu0 %v858
    %1161 = vmatprep.subr.bf16.mxu0 %v863
    %1162 = vmatpush1.bf16.msra.mxu0 %v862
    %1163 = vmatprep.subr.bf16.mxu0 %v867
    %1164 = vmatpush1.bf16.msra.mxu0 %v866
    %1165 = vmatprep.subr.bf16.mxu0 %v871
    %1166 = vmatpush1.bf16.msra.mxu0 %v870
    %1167 = vmatprep.subr.bf16.mxu0 %v875
    %1168 = vmatpush1.bf16.msra.mxu0 %v874
    %1169 = vmatprep.subr.bf16.mxu0 %v879
    %1170 = vmatpush1.bf16.msra.mxu0 %v878
    %1171 = vmatprep.subr.bf16.mxu0 %v883
    %1172 = vmatpush1.bf16.msra.mxu0 %v882
    %1173 = vmatprep.mubr.bf16.mxu0 %v221
    %1174 = vmatmul.mubr.bf16.gmra.mrb[0].mxu0 %v220
    %v1175 = vpop.f32.mrb[0].mxu0
    %v1176 = vadd.f32 %v1133, %v1175
    %v1177 = vpop.f32.mrb[0].mxu0
    %v1178 = vadd.f32 %v1135, %v1177
    %v1179 = vpop.f32.mrb[0].mxu0
    %v1180 = vadd.f32 %v1137, %v1179
    %v1181 = vpop.f32.mrb[0].mxu0
    %v1182 = vadd.f32 %v1139, %v1181
    %1183 = vdwg.mxu0
    %v1184 = vmax.f32 %v1090, 0.0
    %v1185 = vmax.f32 %v1092, 0.0
    %v1186 = vmax.f32 %v1176, 0.0
    %v1187 = vmax.f32 %v1178, 0.0
    %v1188 = vmax.f32 %v1094, 0.0
    %v1189 = vmax.f32 %v1096, 0.0
    %v1190 = vmax.f32 %v1180, 0.0
    %v1191 = vmax.f32 %v1182, 0.0
    %v1192 = vpack.c.bf16 %v1188, %v1184
    %v1193 = vpack.c.bf16 %v1189, %v1185
    %v1194 = vpack.c.bf16 %v1190, %v1186
    %v1195 = vpack.c.bf16 %v1191, %v1187
    %v1196 = vld [vmem:[#allocation4] sm:$0xf]
    %v1197 = vld [vmem:[#allocation4 + $0x4] sm:$0xf]
    %v1198 = vld [vmem:[#allocation4 + $0x8] sm:$0xf]
    %v1199 = vld [vmem:[#allocation4 + $0xc] sm:$0xf]
    %v1200 = vld [vmem:[#allocation4 + $0x10] sm:$0xf]
    %v1201 = vld [vmem:[#allocation4 + $0x14] sm:$0xf]
    %v1202 = vld [vmem:[#allocation4 + $0x18] sm:$0xf]
    %v1203 = vld [vmem:[#allocation4 + $0x1c] sm:$0xf]
    %v1204 = vld [vmem:[#allocation4 + $0x20] sm:$0xf]
    %v1205 = vld [vmem:[#allocation4 + $0x24] sm:$0xf]
    %v1206 = vld [vmem:[#allocation4 + $0x28] sm:$0xf]
    %v1207 = vld [vmem:[#allocation4 + $0x2c] sm:$0xf]
    %v1208 = vld [vmem:[#allocation4 + $0x30] sm:$0xf]
    %v1209 = vld [vmem:[#allocation4 + $0x34] sm:$0xf]
    %v1210 = vld [vmem:[#allocation4 + $0x38] sm:$0xf]
    %v1211 = vld [vmem:[#allocation4 + $0x3c] sm:$0xf]
    %v1212 = vld [vmem:[#allocation4 + $0x40] sm:$0xf]
    %v1213 = vld [vmem:[#allocation4 + $0x44] sm:$0xf]
    %v1214 = vld [vmem:[#allocation4 + $0x48] sm:$0xf]
    %v1215 = vld [vmem:[#allocation4 + $0x4c] sm:$0xf]
    %v1216 = vld [vmem:[#allocation4 + $0x50] sm:$0xf]
    %v1217 = vld [vmem:[#allocation4 + $0x54] sm:$0xf]
    %v1218 = vld [vmem:[#allocation4 + $0x58] sm:$0xf]
    %v1219 = vld [vmem:[#allocation4 + $0x5c] sm:$0xf]
    %v1220 = vld [vmem:[#allocation4 + $0x60] sm:$0xf]
    %v1221 = vld [vmem:[#allocation4 + $0x64] sm:$0xf]
    %v1222 = vld [vmem:[#allocation4 + $0x68] sm:$0xf]
    %v1223 = vld [vmem:[#allocation4 + $0x6c] sm:$0xf]
    %v1224 = vld [vmem:[#allocation4 + $0x70] sm:$0xf]
    %v1225 = vld [vmem:[#allocation4 + $0x74] sm:$0xf]
    %v1226 = vld [vmem:[#allocation4 + $0x78] sm:$0xf]
    %v1227 = vld [vmem:[#allocation4 + $0x7c] sm:$0xf]
    %v1228 = vld [vmem:[#allocation4 + $0x80] sm:$0xf]
    %v1229 = vld [vmem:[#allocation4 + $0x84] sm:$0xf]
    %v1230 = vld [vmem:[#allocation4 + $0x88] sm:$0xf]
    %v1231 = vld [vmem:[#allocation4 + $0x8c] sm:$0xf]
    %v1232 = vld [vmem:[#allocation4 + $0x90] sm:$0xf]
    %v1233 = vld [vmem:[#allocation4 + $0x94] sm:$0xf]
    %v1234 = vld [vmem:[#allocation4 + $0x98] sm:$0xf]
    %v1235 = vld [vmem:[#allocation4 + $0x9c] sm:$0xf]
    %v1236 = vld [vmem:[#allocation4 + $0xa0] sm:$0xf]
    %v1237 = vld [vmem:[#allocation4 + $0xa4] sm:$0xf]
    %v1238 = vld [vmem:[#allocation4 + $0xa8] sm:$0xf]
    %v1239 = vld [vmem:[#allocation4 + $0xac] sm:$0xf]
    %v1240 = vld [vmem:[#allocation4 + $0xb0] sm:$0xf]
    %v1241 = vld [vmem:[#allocation4 + $0xb4] sm:$0xf]
    %v1242 = vld [vmem:[#allocation4 + $0xb8] sm:$0xf]
    %v1243 = vld [vmem:[#allocation4 + $0xbc] sm:$0xf]
    %v1244 = vld [vmem:[#allocation4 + $0xc0] sm:$0xf]
    %v1245 = vld [vmem:[#allocation4 + $0xc4] sm:$0xf]
    %v1246 = vld [vmem:[#allocation4 + $0xc8] sm:$0xf]
    %v1247 = vld [vmem:[#allocation4 + $0xcc] sm:$0xf]
    %v1248 = vld [vmem:[#allocation4 + $0xd0] sm:$0xf]
    %v1249 = vld [vmem:[#allocation4 + $0xd4] sm:$0xf]
    %v1250 = vld [vmem:[#allocation4 + $0xd8] sm:$0xf]
    %v1251 = vld [vmem:[#allocation4 + $0xdc] sm:$0xf]
    %v1252 = vld [vmem:[#allocation4 + $0xe0] sm:$0xf]
    %v1253 = vld [vmem:[#allocation4 + $0xe4] sm:$0xf]
    %v1254 = vld [vmem:[#allocation4 + $0xe8] sm:$0xf]
    %v1255 = vld [vmem:[#allocation4 + $0xec] sm:$0xf]
    %v1256 = vld [vmem:[#allocation4 + $0xf0] sm:$0xf]
    %v1257 = vld [vmem:[#allocation4 + $0xf4] sm:$0xf]
    %v1258 = vld [vmem:[#allocation4 + $0xf8] sm:$0xf]
    %v1259 = vld [vmem:[#allocation4 + $0xfc] sm:$0xf]
    %v1260 = vld [vmem:[%s6] sm:$0x1]
    %v1262 = vlaneseq
    %v1263 = vshrl.u32 %v1262, 7
    %v1264 = vsub.s32 0, %v1263
    %v1265 = vrot.slane %v1260, %v1264
    %v1331 = vunpack.c.l.b16 %v1196
    %v1332 = vunpack.c.l.b16 %v1197
    %v1333 = vunpack.c.l.b16 %v1198
    %v1334 = vunpack.c.l.b16 %v1199
    %v1335 = vunpack.c.l.b16 %v1200
    %v1336 = vunpack.c.l.b16 %v1201
    %v1337 = vunpack.c.l.b16 %v1202
    %v1338 = vunpack.c.l.b16 %v1203
    %v1339 = vunpack.c.l.b16 %v1204
    %v1340 = vunpack.c.l.b16 %v1205
    %v1341 = vunpack.c.l.b16 %v1206
    %v1342 = vunpack.c.l.b16 %v1207
    %v1343 = vunpack.c.l.b16 %v1208
    %v1344 = vunpack.c.l.b16 %v1209
    %v1345 = vunpack.c.l.b16 %v1210
    %v1346 = vunpack.c.l.b16 %v1211
    %v1347 = vunpack.c.l.b16 %v1212
    %v1348 = vunpack.c.l.b16 %v1213
    %v1349 = vunpack.c.l.b16 %v1214
    %v1350 = vunpack.c.l.b16 %v1215
    %v1351 = vunpack.c.l.b16 %v1216
    %v1352 = vunpack.c.l.b16 %v1217
    %v1353 = vunpack.c.l.b16 %v1218
    %v1354 = vunpack.c.l.b16 %v1219
    %v1355 = vunpack.c.l.b16 %v1220
    %v1356 = vunpack.c.l.b16 %v1221
    %v1357 = vunpack.c.l.b16 %v1222
    %v1358 = vunpack.c.l.b16 %v1223
    %v1359 = vunpack.c.l.b16 %v1224
    %v1360 = vunpack.c.l.b16 %v1225
    %v1361 = vunpack.c.l.b16 %v1226
    %v1362 = vunpack.c.l.b16 %v1227
    %v1363 = vunpack.c.l.b16 %v1228
    %v1364 = vunpack.c.l.b16 %v1229
    %v1365 = vunpack.c.l.b16 %v1230
    %v1366 = vunpack.c.l.b16 %v1231
    %v1367 = vunpack.c.l.b16 %v1232
    %v1368 = vunpack.c.l.b16 %v1233
    %v1369 = vunpack.c.l.b16 %v1234
    %v1370 = vunpack.c.l.b16 %v1235
    %v1371 = vunpack.c.l.b16 %v1236
    %v1372 = vunpack.c.l.b16 %v1237
    %v1373 = vunpack.c.l.b16 %v1238
    %v1374 = vunpack.c.l.b16 %v1239
    %v1375 = vunpack.c.l.b16 %v1240
    %v1376 = vunpack.c.l.b16 %v1241
    %v1377 = vunpack.c.l.b16 %v1242
    %v1378 = vunpack.c.l.b16 %v1243
    %v1379 = vunpack.c.l.b16 %v1244
    %v1380 = vunpack.c.l.b16 %v1245
    %v1381 = vunpack.c.l.b16 %v1246
    %v1382 = vunpack.c.l.b16 %v1247
    %v1383 = vunpack.c.l.b16 %v1248
    %v1384 = vunpack.c.l.b16 %v1249
    %v1385 = vunpack.c.l.b16 %v1250
    %v1386 = vunpack.c.l.b16 %v1251
    %v1387 = vunpack.c.l.b16 %v1252
    %v1388 = vunpack.c.l.b16 %v1253
    %v1389 = vunpack.c.l.b16 %v1254
    %v1390 = vunpack.c.l.b16 %v1255
    %v1391 = vunpack.c.l.b16 %v1256
    %v1392 = vunpack.c.l.b16 %v1257
    %v1393 = vunpack.c.l.b16 %v1258
    %v1394 = vunpack.c.l.b16 %v1259
    %v1395 = vpack.c.b16 %v1332, %v1331
    %v1396 = vpack.c.b16 %v1334, %v1333
    %v1397 = vpack.c.b16 %v1336, %v1335
    %v1398 = vpack.c.b16 %v1338, %v1337
    %v1399 = vpack.c.b16 %v1340, %v1339
    %v1400 = vpack.c.b16 %v1342, %v1341
    %v1401 = vpack.c.b16 %v1344, %v1343
    %v1402 = vpack.c.b16 %v1346, %v1345
    %v1403 = vpack.c.b16 %v1348, %v1347
    %v1404 = vpack.c.b16 %v1350, %v1349
    %v1405 = vpack.c.b16 %v1352, %v1351
    %v1406 = vpack.c.b16 %v1354, %v1353
    %v1407 = vpack.c.b16 %v1356, %v1355
    %v1408 = vpack.c.b16 %v1358, %v1357
    %v1409 = vpack.c.b16 %v1360, %v1359
    %v1410 = vpack.c.b16 %v1362, %v1361
    %v1411 = vpack.c.b16 %v1364, %v1363
    %v1412 = vpack.c.b16 %v1366, %v1365
    %v1413 = vpack.c.b16 %v1368, %v1367
    %v1414 = vpack.c.b16 %v1370, %v1369
    %v1415 = vpack.c.b16 %v1372, %v1371
    %v1416 = vpack.c.b16 %v1374, %v1373
    %v1417 = vpack.c.b16 %v1376, %v1375
    %v1418 = vpack.c.b16 %v1378, %v1377
    %v1419 = vpack.c.b16 %v1380, %v1379
    %v1420 = vpack.c.b16 %v1382, %v1381
    %v1421 = vpack.c.b16 %v1384, %v1383
    %v1422 = vpack.c.b16 %v1386, %v1385
    %v1423 = vpack.c.b16 %v1388, %v1387
    %v1424 = vpack.c.b16 %v1390, %v1389
    %v1425 = vpack.c.b16 %v1392, %v1391
    %v1426 = vpack.c.b16 %v1394, %v1393
    %1459 = vmatprep.subr.bf16.mxu0 0
    %1460 = vmatpush1.bf16.msra.mxu0 %v1395
    %1461 = vmatprep.subr.bf16.mxu0 0
    %1462 = vmatpush1.bf16.msra.mxu0 %v1396
    %1463 = vmatprep.subr.bf16.mxu0 0
    %1464 = vmatpush1.bf16.msra.mxu0 %v1397
    %1465 = vmatprep.subr.bf16.mxu0 0
    %1466 = vmatpush1.bf16.msra.mxu0 %v1398
    %1467 = vmatprep.subr.bf16.mxu0 0
    %1468 = vmatpush1.bf16.msra.mxu0 %v1399
    %1469 = vmatprep.subr.bf16.mxu0 0
    %1470 = vmatpush1.bf16.msra.mxu0 %v1400
    %1471 = vmatprep.subr.bf16.mxu0 0
    %1472 = vmatpush1.bf16.msra.mxu0 %v1401
    %1473 = vmatprep.subr.bf16.mxu0 0
    %1474 = vmatpush1.bf16.msra.mxu0 %v1402
    %1475 = vmatprep.subr.bf16.mxu0 0
    %1476 = vmatpush1.bf16.msra.mxu0 %v1403
    %1477 = vmatprep.subr.bf16.mxu0 0
    %1478 = vmatpush1.bf16.msra.mxu0 %v1404
    %1479 = vmatprep.subr.bf16.mxu0 0
    %1480 = vmatpush1.bf16.msra.mxu0 %v1405
    %1481 = vmatprep.subr.bf16.mxu0 0
    %1482 = vmatpush1.bf16.msra.mxu0 %v1406
    %1483 = vmatprep.subr.bf16.mxu0 0
    %1484 = vmatpush1.bf16.msra.mxu0 %v1407
    %1485 = vmatprep.subr.bf16.mxu0 0
    %1486 = vmatpush1.bf16.msra.mxu0 %v1408
    %1487 = vmatprep.subr.bf16.mxu0 0
    %1488 = vmatpush1.bf16.msra.mxu0 %v1409
    %1489 = vmatprep.subr.bf16.mxu0 0
    %1490 = vmatpush1.bf16.msra.mxu0 %v1410
    %1491 = vmatprep.mubr.bf16.mxu0 %v1193
    %1492 = vmatmul.mubr.bf16.gmra.mrb[0].mxu0 %v1192
    %v1493 = vpop.f32.mrb[0].mxu0
    %v1494 = vadd.f32 %v1265, %v1493
    %v1495 = vpop.f32.mrb[0].mxu0
    %v1496 = vpop.f32.mrb[0].mxu0
    %v1497 = vadd.f32 %v1265, %v1496
    %v1498 = vpop.f32.mrb[0].mxu0
    %1499 = vdwg.mxu0
    %1500 = vmatprep.subr.bf16.mxu0 0
    %1501 = vmatpush1.bf16.msra.mxu0 %v1411
    %1502 = vmatprep.subr.bf16.mxu0 0
    %1503 = vmatpush1.bf16.msra.mxu0 %v1412
    %1504 = vmatprep.subr.bf16.mxu0 0
    %1505 = vmatpush1.bf16.msra.mxu0 %v1413
    %1506 = vmatprep.subr.bf16.mxu0 0
    %1507 = vmatpush1.bf16.msra.mxu0 %v1414
    %1508 = vmatprep.subr.bf16.mxu0 0
    %1509 = vmatpush1.bf16.msra.mxu0 %v1415
    %1510 = vmatprep.subr.bf16.mxu0 0
    %1511 = vmatpush1.bf16.msra.mxu0 %v1416
    %1512 = vmatprep.subr.bf16.mxu0 0
    %1513 = vmatpush1.bf16.msra.mxu0 %v1417
    %1514 = vmatprep.subr.bf16.mxu0 0
    %1515 = vmatpush1.bf16.msra.mxu0 %v1418
    %1516 = vmatprep.subr.bf16.mxu0 0
    %1517 = vmatpush1.bf16.msra.mxu0 %v1419
    %1518 = vmatprep.subr.bf16.mxu0 0
    %1519 = vmatpush1.bf16.msra.mxu0 %v1420
    %1520 = vmatprep.subr.bf16.mxu0 0
    %1521 = vmatpush1.bf16.msra.mxu0 %v1421
    %1522 = vmatprep.subr.bf16.mxu0 0
    %1523 = vmatpush1.bf16.msra.mxu0 %v1422
    %1524 = vmatprep.subr.bf16.mxu0 0
    %1525 = vmatpush1.bf16.msra.mxu0 %v1423
    %1526 = vmatprep.subr.bf16.mxu0 0
    %1527 = vmatpush1.bf16.msra.mxu0 %v1424
    %1528 = vmatprep.subr.bf16.mxu0 0
    %1529 = vmatpush1.bf16.msra.mxu0 %v1425
    %1530 = vmatprep.subr.bf16.mxu0 0
    %1531 = vmatpush1.bf16.msra.mxu0 %v1426
    %1532 = vmatprep.mubr.bf16.mxu0 %v1195
    %1533 = vmatmul.mubr.bf16.gmra.mrb[0].mxu0 %v1194
    %v1534 = vpop.f32.mrb[0].mxu0
    %v1535 = vadd.f32 %v1494, %v1534
    %v1536 = vpop.f32.mrb[0].mxu0
    %v1537 = vpop.f32.mrb[0].mxu0
    %v1538 = vadd.f32 %v1497, %v1537
    %v1539 = vpop.f32.mrb[0].mxu0
    %1540 = vdwg.mxu0
    %v1541 = vsub.f32 0.0, %v1535
    %v1542 = vsub.f32 0.0, %v1538
    %v1543 = vmul.f32 %v1541, 1.442695
    %v1544 = vpow.pop %v1543
    %v1545 = vmul.f32 %v1542, 1.442695
    %v1546 = vpow.pop %v1545
    %v1547 = vadd.f32 %v1544, 1.0
    %v1548 = vadd.f32 %v1546, 1.0
    %v1549 = vrcp.pop %v1547
    %v1550 = vrcp.pop %v1548
    %v1551 = vpack.c.bf16 %v1550, %v1549
    %v1553 = vunpack.c.l.b16 %v1551
    %v1554 = vunpack.c.h.b16 %v1551
    %v1555 = vpack.c.b16 %v1553, %v1553
    %v1556 = vpack.c.b16 %v1554, %v1554
    %1559 = vst [vmem:[%s7] sm:$0xf] %v1555
    %1560 = vst [vmem:[%s7 + $0x4] sm:$0xf] %v1556
    // Predicated region
    $region38: #{discriminator_forward.1} parent=1 // pred_check
      _
    $region39: #{discriminator_forward.1} parent=1 // pred_check_branch
      %1562 = sbr.rel (0) target = $region41
    $region40: #{discriminator_forward.1} parent=1 // pred_region
      _
    $region41: #{discriminator_forward.1} parent=1 // pred_fallthru
      _
    // Predicated region
    $region42: #{discriminator_forward.1} parent=1 // pred_check
      _
    $region43: #{discriminator_forward.1} parent=1 // pred_check_branch
      %1564 = sbr.rel (0) target = $region45
    $region44: #{discriminator_forward.1} parent=1 // pred_region
      _
    $region45: #{discriminator_forward.1} parent=1 // pred_fallthru
      _
    %1565 = vsyncpa [#allocation3], 1
    %1566 = vsyncpa [#allocation5], 1

// kernel: discriminator_forward.1
$region0: #{discriminator_forward.1}
  #allocation0 [shape = 'u32[]', space=smem, size = 0x4, offset = 0x4, fixed_abs, tag = 'smem constant byte address 0x4 - core index']
  #allocation1 [shape = 'u32[144,128]{1,0:T(1,128)}', space=vmem, size = 0x12000, scoped, tag = 'internal scratch']
  %s0 = inlined_call_operand.vmem [shape: bf16[16,11], index: 0, kind: input, shape index: {}]
  %s1 = inlined_call_operand.vmem [shape: bf16[11,512], index: 1, kind: input, shape index: {}]
  %s2 = inlined_call_operand.vmem [shape: f32[1,512], index: 2, kind: input, shape index: {}]
  %s3 = inlined_call_operand.hbm [shape: bf16[512,512], index: 3, kind: input, shape index: {}]
  %s4 = inlined_call_operand.vmem [shape: f32[1,512], index: 4, kind: input, shape index: {}]
  %s5 = inlined_call_operand.hbm [shape: bf16[512,128], index: 5, kind: input, shape index: {}]
  %s6 = inlined_call_operand.vmem [shape: f32[1,128], index: 6, kind: input, shape index: {}]
  %s7 = inlined_call_operand.vmem [shape: bf16[16,128], index: 7, kind: output, shape index: {}]
  %s8 = sld [smem:[#allocation0]]
  $region46: #{discriminator_forward.1} parent=0
    _
  %s10 = ssub.s32 1, %s8
  %s11 = scalar_select 0, %s10, %s8
  $region1: #{discriminator_forward.1} parent=0
    #allocation2 [shape = 'u8[524288]{0}', space=vmem, size = 0x80000, scoped, tag = 'input window, operand 3, single buffered']
    #allocation3 [shape = 's32[1]{0}', space=sflag, size = 0x4, scoped, tag = 'scoped memory for discriminator_forward.1']
    #allocation4 [shape = 'u8[131072]{0}', space=vmem, size = 0x20000, scoped, tag = 'input window, operand 5, single buffered']
    #allocation5 [shape = 's32[1]{0}', space=sflag, size = 0x4, scoped, tag = 'scoped memory for discriminator_forward.1']
    %12 = vsyncpa [#allocation3], 0
    %13 = vsyncpa [#allocation5], 0
    // Predicated region
    $region2: #{discriminator_forward.1} parent=1 // pred_check
      _
    $region3: #{discriminator_forward.1} parent=1 // pred_check_branch
      %15 = sbr.rel (0) target = $region5
    $region4: #{discriminator_forward.1} parent=1 // pred_region
      _
    $region5: #{discriminator_forward.1} parent=1 // pred_fallthru
      _
    // Predicated region
    $region6: #{discriminator_forward.1} parent=1 // pred_check
      _
    $region7: #{discriminator_forward.1} parent=1 // pred_check_branch
      %17 = sbr.rel (0) target = $region9
    $region8: #{discriminator_forward.1} parent=1 // pred_region
      _
    $region9: #{discriminator_forward.1} parent=1 // pred_fallthru
      _
    // Predicated region
    $region10: #{discriminator_forward.1} parent=1 // pred_check
      _
    $region11: #{discriminator_forward.1} parent=1 // pred_check_branch
      %19 = sbr.rel (0) target = $region13
    $region12: #{discriminator_forward.1} parent=1 // pred_region
      _
    $region13: #{discriminator_forward.1} parent=1 // pred_fallthru
      _
    // Predicated region
    $region14: #{discriminator_forward.1} parent=1 // pred_check
      _
    $region15: #{discriminator_forward.1} parent=1 // pred_check_branch
      %21 = sbr.rel (0) target = $region17
    $region16: #{discriminator_forward.1} parent=1 // pred_region
      %s23 = ssub.s32 16384, 16384
      %24 = vsyncadd [#allocation3], %s23
      %s25 = sshll.u32 [#allocation2], 4
      %s26 = int_to_ptr.vmem [resolvable:$true] %s25
      %31 = dma.hbm_to_vmem [thread:$0]  %s3, 16384, %s26, [#allocation3], 256, 256, 16
    $region17: #{discriminator_forward.1} parent=1 // pred_fallthru
      _
    // Predicated region
    $region18: #{discriminator_forward.1} parent=1 // pred_check
      _
    $region19: #{discriminator_forward.1} parent=1 // pred_check_branch
      %33 = sbr.rel (0) target = $region21
    $region20: #{discriminator_forward.1} parent=1 // pred_region
      _
    $region21: #{discriminator_forward.1} parent=1 // pred_fallthru
      _
    // Predicated region
    $region22: #{discriminator_forward.1} parent=1 // pred_check
      _
    $region23: #{discriminator_forward.1} parent=1 // pred_check_branch
      %35 = sbr.rel (0) target = $region25
    $region24: #{discriminator_forward.1} parent=1 // pred_region
      %s37 = ssub.s32 4096, 4096
      %38 = vsyncadd [#allocation5], %s37
      %s39 = sshll.u32 [#allocation4], 4
      %s40 = int_to_ptr.vmem [resolvable:$true] %s39
      %45 = dma.hbm_to_vmem [thread:$0]  %s5, 4096, %s40, [#allocation5], 64, 64, 4
    $region25: #{discriminator_forward.1} parent=1 // pred_fallthru
      _
    // Predicated region
    $region26: #{discriminator_forward.1} parent=1 // pred_check
      _
    $region27: #{discriminator_forward.1} parent=1 // pred_check_branch
      %47 = sbr.rel (0) target = $region29
    $region28: #{discriminator_forward.1} parent=1 // pred_region
      _
    $region29: #{discriminator_forward.1} parent=1 // pred_fallthru
      _
    // Predicated region
    $region30: #{discriminator_forward.1} parent=1 // pred_check
      _
    $region31: #{discriminator_forward.1} parent=1 // pred_check_branch
      %49 = sbr.rel (0) target = $region33
    $region32: #{discriminator_forward.1} parent=1 // pred_region
      %50 = dma.done [#allocation3], 16384
    $region33: #{discriminator_forward.1} parent=1 // pred_fallthru
      _
    // Predicated region
    $region34: #{discriminator_forward.1} parent=1 // pred_check
      _
    $region35: #{discriminator_forward.1} parent=1 // pred_check_branch
      %52 = sbr.rel (0) target = $region37
    $region36: #{discriminator_forward.1} parent=1 // pred_region
      %53 = dma.done [#allocation5], 4096
    $region37: #{discriminator_forward.1} parent=1 // pred_fallthru
      _
    %v55 = vld [vmem:[%s0] sm:$0xf]
    %v56 = vld [vmem:[%s0 + $0x4] sm:$0xf]
    %v57 = vld [vmem:[%s1] sm:$0xff]
    %v58 = vld [vmem:[%s1 + $0x8] sm:$0xff]
    %v59 = vld [vmem:[%s1 + $0x10] sm:$0x33]
    %v60 = vld [vmem:[%s1 + $0x18] sm:$0x33]
    %v61 = vld [vmem:[%s2] sm:$0xf]
    %v63 = vlaneseq
    %v64 = vshrl.u32 %v63, 7
    %v65 = vsub.s32 0, %v64
    %v66 = vrot.slane %v61, %v65
    %v67 = vlaneseq
    %v68 = vshrl.u32 %v67, 7
    %v69 = vsub.s32 1, %v68
    %v70 = vrot.slane %v61, %v69
    %v71 = vlaneseq
    %v72 = vshrl.u32 %v71, 7
    %v73 = vsub.s32 2, %v72
    %v74 = vrot.slane %v61, %v73
    %v75 = vlaneseq
    %v76 = vshrl.u32 %v75, 7
    %v77 = vsub.s32 3, %v76
    %v78 = vrot.slane %v61, %v77
    %v85 = vunpack.c.l.b16 %v55
    %v86 = vunpack.c.l.b16 %v56
    %v87 = vpack.c.b16 %v86, %v85
    %v92 = vunpack.c.l.b16 %v57
    %v93 = vunpack.c.h.b16 %v57
    %v94 = vunpack.c.l.b16 %v58
    %v95 = vunpack.c.h.b16 %v58
    %v96 = vunpack.c.l.b16 %v59
    %v97 = vunpack.c.h.b16 %v59
    %v98 = vunpack.c.l.b16 %v60
    %v99 = vunpack.c.h.b16 %v60
    %v100 = vpack.c.b16 %v96, %v92
    %v101 = vpack.c.b16 %v97, %v93
    %v102 = vpack.c.b16 %v98, %v94
    %v103 = vpack.c.b16 %v99, %v95
    %vm104 = vcmask 89088
    %v106 = vsel %vm104, %v87, 0
    %vm108 = vcmask 1044480
    %vm109 = vcmask 1045504
    %v110 = vsel %vm108, 4294967295, 65535
    %v111 = vsel %vm109, %v110, 0
    %v113 = vand.u32 %v100, %v111
    %v116 = vand.u32 %v101, %v111
    %v119 = vand.u32 %v102, %v111
    %v122 = vand.u32 %v103, %v111
    %124 = vmatprep.subr.bf16.mxu0 %v116
    %125 = vmatpush1.bf16.msra.mxu0 %v113
    %126 = vmatprep.subr.bf16.mxu0 0
    %127 = vmatpush1.bf16.msra.mxu0 0
    %128 = vmatprep.subr.bf16.mxu0 0
    %129 = vmatpush1.bf16.msra.mxu0 0
    %130 = vmatprep.subr.bf16.mxu0 0
    %131 = vmatpush1.bf16.msra.mxu0 0
    %132 = vmatprep.subr.bf16.mxu0 0
    %133 = vmatpush1.bf16.msra.mxu0 0
    %134 = vmatprep.subr.bf16.mxu0 0
    %135 = vmatpush1.bf16.msra.mxu0 0
    %136 = vmatprep.subr.bf16.mxu0 0
    %137 = vmatpush1.bf16.msra.mxu0 0
    %138 = vmatprep.subr.bf16.mxu0 0
    %139 = vmatpush1.bf16.msra.mxu0 0
    %140 = vmatprep.subr.bf16.mxu0 0
    %141 = vmatpush1.bf16.msra.mxu0 0
    %142 = vmatprep.subr.bf16.mxu0 0
    %143 = vmatpush1.bf16.msra.mxu0 0
    %144 = vmatprep.subr.bf16.mxu0 0
    %145 = vmatpush1.bf16.msra.mxu0 0
    %146 = vmatprep.subr.bf16.mxu0 0
    %147 = vmatpush1.bf16.msra.mxu0 0
    %148 = vmatprep.subr.bf16.mxu0 0
    %149 = vmatpush1.bf16.msra.mxu0 0
    %150 = vmatprep.subr.bf16.mxu0 0
    %151 = vmatpush1.bf16.msra.mxu0 0
    %152 = vmatprep.subr.bf16.mxu0 0
    %153 = vmatpush1.bf16.msra.mxu0 0
    %154 = vmatprep.subr.bf16.mxu0 0
    %155 = vmatpush1.bf16.msra.mxu0 0
    %156 = vmatprep.mubr.bf16.mxu0 0
    %157 = vmatmul.mubr.bf16.gmra.mrb[0].mxu0 %v106
    %v158 = vpop.f32.mrb[0].mxu0
    %v159 = vadd.f32 %v66, %v158
    %v160 = vpop.f32.mrb[0].mxu0
    %v161 = vadd.f32 %v70, %v160
    %v162 = vpop.f32.mrb[0].mxu0
    %v163 = vadd.f32 %v66, %v162
    %v164 = vpop.f32.mrb[0].mxu0
    %v165 = vadd.f32 %v70, %v164
    %166 = vdwg.mxu0
    %167 = vmatprep.subr.bf16.mxu0 %v122
    %168 = vmatpush1.bf16.msra.mxu0 %v119
    %169 = vmatprep.subr.bf16.mxu0 0
    %170 = vmatpush1.bf16.msra.mxu0 0
    %171 = vmatprep.subr.bf16.mxu0 0
    %172 = vmatpush1.bf16.msra.mxu0 0
    %173 = vmatprep.subr.bf16.mxu0 0
    %174 = vmatpush1.bf16.msra.mxu0 0
    %175 = vmatprep.subr.bf16.mxu0 0
    %176 = vmatpush1.bf16.msra.mxu0 0
    %177 = vmatprep.subr.bf16.mxu0 0
    %178 = vmatpush1.bf16.msra.mxu0 0
    %179 = vmatprep.subr.bf16.mxu0 0
    %180 = vmatpush1.bf16.msra.mxu0 0
    %181 = vmatprep.subr.bf16.mxu0 0
    %182 = vmatpush1.bf16.msra.mxu0 0
    %183 = vmatprep.subr.bf16.mxu0 0
    %184 = vmatpush1.bf16.msra.mxu0 0
    %185 = vmatprep.subr.bf16.mxu0 0
    %186 = vmatpush1.bf16.msra.mxu0 0
    %187 = vmatprep.subr.bf16.mxu0 0
    %188 = vmatpush1.bf16.msra.mxu0 0
    %189 = vmatprep.subr.bf16.mxu0 0
    %190 = vmatpush1.bf16.msra.mxu0 0
    %191 = vmatprep.subr.bf16.mxu0 0
    %192 = vmatpush1.bf16.msra.mxu0 0
    %193 = vmatprep.subr.bf16.mxu0 0
    %194 = vmatpush1.bf16.msra.mxu0 0
    %195 = vmatprep.subr.bf16.mxu0 0
    %196 = vmatpush1.bf16.msra.mxu0 0
    %197 = vmatprep.subr.bf16.mxu0 0
    %198 = vmatpush1.bf16.msra.mxu0 0
    %199 = vmatprep.mubr.bf16.mxu0 0
    %200 = vmatmul.mubr.bf16.gmra.mrb[0].mxu0 %v106
    %v201 = vpop.f32.mrb[0].mxu0
    %v202 = vadd.f32 %v74, %v201
    %v203 = vpop.f32.mrb[0].mxu0
    %v204 = vadd.f32 %v78, %v203
    %v205 = vpop.f32.mrb[0].mxu0
    %v206 = vadd.f32 %v74, %v205
    %v207 = vpop.f32.mrb[0].mxu0
    %v208 = vadd.f32 %v78, %v207
    %209 = vdwg.mxu0
    %v210 = vmax.f32 %v159, 0.0
    %v211 = vmax.f32 %v161, 0.0
    %v212 = vmax.f32 %v202, 0.0
    %v213 = vmax.f32 %v204, 0.0
    %v214 = vmax.f32 %v163, 0.0
    %v215 = vmax.f32 %v165, 0.0
    %v216 = vmax.f32 %v206, 0.0
    %v217 = vmax.f32 %v208, 0.0
    %v218 = vpack.c.bf16 %v214, %v210
    %v219 = vpack.c.bf16 %v215, %v211
    %v220 = vpack.c.bf16 %v216, %v212
    %v221 = vpack.c.bf16 %v217, %v213
    %v222 = vld [vmem:[#allocation2] sm:$0xff]
    %v223 = vld [vmem:[#allocation2 + $0x8] sm:$0xff]
    %v224 = vld [vmem:[#allocation2 + $0x10] sm:$0xff]
    %v225 = vld [vmem:[#allocation2 + $0x18] sm:$0xff]
    %v226 = vld [vmem:[#allocation2 + $0x20] sm:$0xff]
    %v227 = vld [vmem:[#allocation2 + $0x28] sm:$0xff]
    %v228 = vld [vmem:[#allocation2 + $0x30] sm:$0xff]
    %v229 = vld [vmem:[#allocation2 + $0x38] sm:$0xff]
    %v230 = vld [vmem:[#allocation2 + $0x40] sm:$0xff]
    %v231 = vld [vmem:[#allocation2 + $0x48] sm:$0xff]
    %v232 = vld [vmem:[#allocation2 + $0x50] sm:$0xff]
    %v233 = vld [vmem:[#allocation2 + $0x58] sm:$0xff]
    %v234 = vld [vmem:[#allocation2 + $0x60] sm:$0xff]
    %v235 = vld [vmem:[#allocation2 + $0x68] sm:$0xff]
    %v236 = vld [vmem:[#allocation2 + $0x70] sm:$0xff]
    %v237 = vld [vmem:[#allocation2 + $0x78] sm:$0xff]
    %v238 = vld [vmem:[#allocation2 + $0x80] sm:$0xff]
    %v239 = vld [vmem:[#allocation2 + $0x88] sm:$0xff]
    %v240 = vld [vmem:[#allocation2 + $0x90] sm:$0xff]
    %v241 = vld [vmem:[#allocation2 + $0x98] sm:$0xff]
    %v242 = vld [vmem:[#allocation2 + $0xa0] sm:$0xff]
    %v243 = vld [vmem:[#allocation2 + $0xa8] sm:$0xff]
    %v244 = vld [vmem:[#allocation2 + $0xb0] sm:$0xff]
    %v245 = vld [vmem:[#allocation2 + $0xb8] sm:$0xff]
    %v246 = vld [vmem:[#allocation2 + $0xc0] sm:$0xff]
    %v247 = vld [vmem:[#allocation2 + $0xc8] sm:$0xff]
    %v248 = vld [vmem:[#allocation2 + $0xd0] sm:$0xff]
    %v249 = vld [vmem:[#allocation2 + $0xd8] sm:$0xff]
    %v250 = vld [vmem:[#allocation2 + $0xe0] sm:$0xff]
    %v251 = vld [vmem:[#allocation2 + $0xe8] sm:$0xff]
    %v252 = vld [vmem:[#allocation2 + $0xf0] sm:$0xff]
    %v253 = vld [vmem:[#allocation2 + $0xf8] sm:$0xff]
    %v254 = vld [vmem:[#allocation2 + $0x100] sm:$0xff]
    %v255 = vld [vmem:[#allocation2 + $0x108] sm:$0xff]
    %v256 = vld [vmem:[#allocation2 + $0x110] sm:$0xff]
    %v257 = vld [vmem:[#allocation2 + $0x118] sm:$0xff]
    %v258 = vld [vmem:[#allocation2 + $0x120] sm:$0xff]
    %v259 = vld [vmem:[#allocation2 + $0x128] sm:$0xff]
    %v260 = vld [vmem:[#allocation2 + $0x130] sm:$0xff]
    %v261 = vld [vmem:[#allocation2 + $0x138] sm:$0xff]
    %v262 = vld [vmem:[#allocation2 + $0x140] sm:$0xff]
    %v263 = vld [vmem:[#allocation2 + $0x148] sm:$0xff]
    %v264 = vld [vmem:[#allocation2 + $0x150] sm:$0xff]
    %v265 = vld [vmem:[#allocation2 + $0x158] sm:$0xff]
    %v266 = vld [vmem:[#allocation2 + $0x160] sm:$0xff]
    %v267 = vld [vmem:[#allocation2 + $0x168] sm:$0xff]
    %v268 = vld [vmem:[#allocation2 + $0x170] sm:$0xff]
    %v269 = vld [vmem:[#allocation2 + $0x178] sm:$0xff]
    %v270 = vld [vmem:[#allocation2 + $0x180] sm:$0xff]
    %v271 = vld [vmem:[#allocation2 + $0x188] sm:$0xff]
    %v272 = vld [vmem:[#allocation2 + $0x190] sm:$0xff]
    %v273 = vld [vmem:[#allocation2 + $0x198] sm:$0xff]
    %v274 = vld [vmem:[#allocation2 + $0x1a0] sm:$0xff]
    %v275 = vld [vmem:[#allocation2 + $0x1a8] sm:$0xff]
    %v276 = vld [vmem:[#allocation2 + $0x1b0] sm:$0xff]
    %v277 = vld [vmem:[#allocation2 + $0x1b8] sm:$0xff]
    %v278 = vld [vmem:[#allocation2 + $0x1c0] sm:$0xff]
    %v279 = vld [vmem:[#allocation2 + $0x1c8] sm:$0xff]
    %v280 = vld [vmem:[#allocation2 + $0x1d0] sm:$0xff]
    %v281 = vld [vmem:[#allocation2 + $0x1d8] sm:$0xff]
    %v282 = vld [vmem:[#allocation2 + $0x1e0] sm:$0xff]
    %v283 = vld [vmem:[#allocation2 + $0x1e8] sm:$0xff]
    %v284 = vld [vmem:[#allocation2 + $0x1f0] sm:$0xff]
    %v285 = vld [vmem:[#allocation2 + $0x1f8] sm:$0xff]
    %v286 = vld [vmem:[#allocation2 + $0x200] sm:$0xff]
    %v287 = vld [vmem:[#allocation2 + $0x208] sm:$0xff]
    %v288 = vld [vmem:[#allocation2 + $0x210] sm:$0xff]
    %v289 = vld [vmem:[#allocation2 + $0x218] sm:$0xff]
    %v290 = vld [vmem:[#allocation2 + $0x220] sm:$0xff]
    %v291 = vld [vmem:[#allocation2 + $0x228] sm:$0xff]
    %v292 = vld [vmem:[#allocation2 + $0x230] sm:$0xff]
    %v293 = vld [vmem:[#allocation2 + $0x238] sm:$0xff]
    %v294 = vld [vmem:[#allocation2 + $0x240] sm:$0xff]
    %v295 = vld [vmem:[#allocation2 + $0x248] sm:$0xff]
    %v296 = vld [vmem:[#allocation2 + $0x250] sm:$0xff]
    %v297 = vld [vmem:[#allocation2 + $0x258] sm:$0xff]
    %v298 = vld [vmem:[#allocation2 + $0x260] sm:$0xff]
    %v299 = vld [vmem:[#allocation2 + $0x268] sm:$0xff]
    %v300 = vld [vmem:[#allocation2 + $0x270] sm:$0xff]
    %v301 = vld [vmem:[#allocation2 + $0x278] sm:$0xff]
    %v302 = vld [vmem:[#allocation2 + $0x280] sm:$0xff]
    %v303 = vld [vmem:[#allocation2 + $0x288] sm:$0xff]
    %v304 = vld [vmem:[#allocation2 + $0x290] sm:$0xff]
    %v305 = vld [vmem:[#allocation2 + $0x298] sm:$0xff]
    %v306 = vld [vmem:[#allocation2 + $0x2a0] sm:$0xff]
    %v307 = vld [vmem:[#allocation2 + $0x2a8] sm:$0xff]
    %v308 = vld [vmem:[#allocation2 + $0x2b0] sm:$0xff]
    %v309 = vld [vmem:[#allocation2 + $0x2b8] sm:$0xff]
    %v310 = vld [vmem:[#allocation2 + $0x2c0] sm:$0xff]
    %v311 = vld [vmem:[#allocation2 + $0x2c8] sm:$0xff]
    %v312 = vld [vmem:[#allocation2 + $0x2d0] sm:$0xff]
    %v313 = vld [vmem:[#allocation2 + $0x2d8] sm:$0xff]
    %v314 = vld [vmem:[#allocation2 + $0x2e0] sm:$0xff]
    %v315 = vld [vmem:[#allocation2 + $0x2e8] sm:$0xff]
    %v316 = vld [vmem:[#allocation2 + $0x2f0] sm:$0xff]
    %v317 = vld [vmem:[#allocation2 + $0x2f8] sm:$0xff]
    %v318 = vld [vmem:[#allocation2 + $0x300] sm:$0xff]
    %v319 = vld [vmem:[#allocation2 + $0x308] sm:$0xff]
    %v320 = vld [vmem:[#allocation2 + $0x310] sm:$0xff]
    %v321 = vld [vmem:[#allocation2 + $0x318] sm:$0xff]
    %v322 = vld [vmem:[#allocation2 + $0x320] sm:$0xff]
    %v323 = vld [vmem:[#allocation2 + $0x328] sm:$0xff]
    %v324 = vld [vmem:[#allocation2 + $0x330] sm:$0xff]
    %v325 = vld [vmem:[#allocation2 + $0x338] sm:$0xff]
    %v326 = vld [vmem:[#allocation2 + $0x340] sm:$0xff]
    %v327 = vld [vmem:[#allocation2 + $0x348] sm:$0xff]
    %v328 = vld [vmem:[#allocation2 + $0x350] sm:$0xff]
    %v329 = vld [vmem:[#allocation2 + $0x358] sm:$0xff]
    %v330 = vld [vmem:[#allocation2 + $0x360] sm:$0xff]
    %v331 = vld [vmem:[#allocation2 + $0x368] sm:$0xff]
    %v332 = vld [vmem:[#allocation2 + $0x370] sm:$0xff]
    %v333 = vld [vmem:[#allocation2 + $0x378] sm:$0xff]
    %v334 = vld [vmem:[#allocation2 + $0x380] sm:$0xff]
    %v335 = vld [vmem:[#allocation2 + $0x388] sm:$0xff]
    %v336 = vld [vmem:[#allocation2 + $0x390] sm:$0xff]
    %v337 = vld [vmem:[#allocation2 + $0x398] sm:$0xff]
    %v338 = vld [vmem:[#allocation2 + $0x3a0] sm:$0xff]
    %v339 = vld [vmem:[#allocation2 + $0x3a8] sm:$0xff]
    %v340 = vld [vmem:[#allocation2 + $0x3b0] sm:$0xff]
    %v341 = vld [vmem:[#allocation2 + $0x3b8] sm:$0xff]
    %v342 = vld [vmem:[#allocation2 + $0x3c0] sm:$0xff]
    %v343 = vld [vmem:[#allocation2 + $0x3c8] sm:$0xff]
    %v344 = vld [vmem:[#allocation2 + $0x3d0] sm:$0xff]
    %v345 = vld [vmem:[#allocation2 + $0x3d8] sm:$0xff]
    %v346 = vld [vmem:[#allocation2 + $0x3e0] sm:$0xff]
    %v347 = vld [vmem:[#allocation2 + $0x3e8] sm:$0xff]
    %v348 = vld [vmem:[#allocation2 + $0x3f0] sm:$0xff]
    %v349 = vld [vmem:[#allocation2 + $0x3f8] sm:$0xff]
    %v350 = vld [vmem:[%s4] sm:$0xf]
    %v352 = vlaneseq
    %v353 = vshrl.u32 %v352, 7
    %v354 = vsub.s32 0, %v353
    %v355 = vrot.slane %v350, %v354
    %v356 = vlaneseq
    %v357 = vshrl.u32 %v356, 7
    %v358 = vsub.s32 1, %v357
    %v359 = vrot.slane %v350, %v358
    %v360 = vlaneseq
    %v361 = vshrl.u32 %v360, 7
    %v362 = vsub.s32 2, %v361
    %v363 = vrot.slane %v350, %v362
    %v364 = vlaneseq
    %v365 = vshrl.u32 %v364, 7
    %v366 = vsub.s32 3, %v365
    %v367 = vrot.slane %v350, %v366
    %v500 = vunpack.c.l.b16 %v222
    %v501 = vunpack.c.h.b16 %v222
    %v502 = vunpack.c.l.b16 %v223
    %v503 = vunpack.c.h.b16 %v223
    %v504 = vunpack.c.l.b16 %v224
    %v505 = vunpack.c.h.b16 %v224
    %v506 = vunpack.c.l.b16 %v225
    %v507 = vunpack.c.h.b16 %v225
    %v508 = vunpack.c.l.b16 %v226
    %v509 = vunpack.c.h.b16 %v226
    %v510 = vunpack.c.l.b16 %v227
    %v511 = vunpack.c.h.b16 %v227
    %v512 = vunpack.c.l.b16 %v228
    %v513 = vunpack.c.h.b16 %v228
    %v514 = vunpack.c.l.b16 %v229
    %v515 = vunpack.c.h.b16 %v229
    %v516 = vunpack.c.l.b16 %v230
    %v517 = vunpack.c.h.b16 %v230
    %v518 = vunpack.c.l.b16 %v231
    %v519 = vunpack.c.h.b16 %v231
    %v520 = vunpack.c.l.b16 %v232
    %v521 = vunpack.c.h.b16 %v232
    %v522 = vunpack.c.l.b16 %v233
    %v523 = vunpack.c.h.b16 %v233
    %v524 = vunpack.c.l.b16 %v234
    %v525 = vunpack.c.h.b16 %v234
    %v526 = vunpack.c.l.b16 %v235
    %v527 = vunpack.c.h.b16 %v235
    %v528 = vunpack.c.l.b16 %v236
    %v529 = vunpack.c.h.b16 %v236
    %v530 = vunpack.c.l.b16 %v237
    %v531 = vunpack.c.h.b16 %v237
    %v532 = vunpack.c.l.b16 %v238
    %v533 = vunpack.c.h.b16 %v238
    %v534 = vunpack.c.l.b16 %v239
    %v535 = vunpack.c.h.b16 %v239
    %v536 = vunpack.c.l.b16 %v240
    %v537 = vunpack.c.h.b16 %v240
    %v538 = vunpack.c.l.b16 %v241
    %v539 = vunpack.c.h.b16 %v241
    %v540 = vunpack.c.l.b16 %v242
    %v541 = vunpack.c.h.b16 %v242
    %v542 = vunpack.c.l.b16 %v243
    %v543 = vunpack.c.h.b16 %v243
    %v544 = vunpack.c.l.b16 %v244
    %v545 = vunpack.c.h.b16 %v244
    %v546 = vunpack.c.l.b16 %v245
    %v547 = vunpack.c.h.b16 %v245
    %v548 = vunpack.c.l.b16 %v246
    %v549 = vunpack.c.h.b16 %v246
    %v550 = vunpack.c.l.b16 %v247
    %v551 = vunpack.c.h.b16 %v247
    %v552 = vunpack.c.l.b16 %v248
    %v553 = vunpack.c.h.b16 %v248
    %v554 = vunpack.c.l.b16 %v249
    %v555 = vunpack.c.h.b16 %v249
    %v556 = vunpack.c.l.b16 %v250
    %v557 = vunpack.c.h.b16 %v250
    %v558 = vunpack.c.l.b16 %v251
    %v559 = vunpack.c.h.b16 %v251
    %v560 = vunpack.c.l.b16 %v252
    %v561 = vunpack.c.h.b16 %v252
    %v562 = vunpack.c.l.b16 %v253
    %v563 = vunpack.c.h.b16 %v253
    %v564 = vunpack.c.l.b16 %v254
    %v565 = vunpack.c.h.b16 %v254
    %v566 = vunpack.c.l.b16 %v255
    %v567 = vunpack.c.h.b16 %v255
    %v568 = vunpack.c.l.b16 %v256
    %v569 = vunpack.c.h.b16 %v256
    %v570 = vunpack.c.l.b16 %v257
    %v571 = vunpack.c.h.b16 %v257
    %v572 = vunpack.c.l.b16 %v258
    %v573 = vunpack.c.h.b16 %v258
    %v574 = vunpack.c.l.b16 %v259
    %v575 = vunpack.c.h.b16 %v259
    %v576 = vunpack.c.l.b16 %v260
    %v577 = vunpack.c.h.b16 %v260
    %v578 = vunpack.c.l.b16 %v261
    %v579 = vunpack.c.h.b16 %v261
    %v580 = vunpack.c.l.b16 %v262
    %v581 = vunpack.c.h.b16 %v262
    %v582 = vunpack.c.l.b16 %v263
    %v583 = vunpack.c.h.b16 %v263
    %v584 = vunpack.c.l.b16 %v264
    %v585 = vunpack.c.h.b16 %v264
    %v586 = vunpack.c.l.b16 %v265
    %v587 = vunpack.c.h.b16 %v265
    %v588 = vunpack.c.l.b16 %v266
    %v589 = vunpack.c.h.b16 %v266
    %v590 = vunpack.c.l.b16 %v267
    %v591 = vunpack.c.h.b16 %v267
    %v592 = vunpack.c.l.b16 %v268
    %v593 = vunpack.c.h.b16 %v268
    %v594 = vunpack.c.l.b16 %v269
    %v595 = vunpack.c.h.b16 %v269
    %v596 = vunpack.c.l.b16 %v270
    %v597 = vunpack.c.h.b16 %v270
    %v598 = vunpack.c.l.b16 %v271
    %v599 = vunpack.c.h.b16 %v271
    %v600 = vunpack.c.l.b16 %v272
    %v601 = vunpack.c.h.b16 %v272
    %v602 = vunpack.c.l.b16 %v273
    %v603 = vunpack.c.h.b16 %v273
    %v604 = vunpack.c.l.b16 %v274
    %v605 = vunpack.c.h.b16 %v274
    %v606 = vunpack.c.l.b16 %v275
    %v607 = vunpack.c.h.b16 %v275
    %v608 = vunpack.c.l.b16 %v276
    %v609 = vunpack.c.h.b16 %v276
    %v610 = vunpack.c.l.b16 %v277
    %v611 = vunpack.c.h.b16 %v277
    %v612 = vunpack.c.l.b16 %v278
    %v613 = vunpack.c.h.b16 %v278
    %v614 = vunpack.c.l.b16 %v279
    %v615 = vunpack.c.h.b16 %v279
    %v616 = vunpack.c.l.b16 %v280
    %v617 = vunpack.c.h.b16 %v280
    %v618 = vunpack.c.l.b16 %v281
    %v619 = vunpack.c.h.b16 %v281
    %v620 = vunpack.c.l.b16 %v282
    %v621 = vunpack.c.h.b16 %v282
    %v622 = vunpack.c.l.b16 %v283
    %v623 = vunpack.c.h.b16 %v283
    %v624 = vunpack.c.l.b16 %v284
    %v625 = vunpack.c.h.b16 %v284
    %v626 = vunpack.c.l.b16 %v285
    %v627 = vunpack.c.h.b16 %v285
    %v628 = vunpack.c.l.b16 %v286
    %v629 = vunpack.c.h.b16 %v286
    %v630 = vunpack.c.l.b16 %v287
    %v631 = vunpack.c.h.b16 %v287
    %v632 = vunpack.c.l.b16 %v288
    %v633 = vunpack.c.h.b16 %v288
    %v634 = vunpack.c.l.b16 %v289
    %v635 = vunpack.c.h.b16 %v289
    %v636 = vunpack.c.l.b16 %v290
    %v637 = vunpack.c.h.b16 %v290
    %v638 = vunpack.c.l.b16 %v291
    %v639 = vunpack.c.h.b16 %v291
    %v640 = vunpack.c.l.b16 %v292
    %v641 = vunpack.c.h.b16 %v292
    %v642 = vunpack.c.l.b16 %v293
    %v643 = vunpack.c.h.b16 %v293
    %v644 = vunpack.c.l.b16 %v294
    %v645 = vunpack.c.h.b16 %v294
    %v646 = vunpack.c.l.b16 %v295
    %v647 = vunpack.c.h.b16 %v295
    %v648 = vunpack.c.l.b16 %v296
    %v649 = vunpack.c.h.b16 %v296
    %v650 = vunpack.c.l.b16 %v297
    %v651 = vunpack.c.h.b16 %v297
    %v652 = vunpack.c.l.b16 %v298
    %v653 = vunpack.c.h.b16 %v298
    %v654 = vunpack.c.l.b16 %v299
    %v655 = vunpack.c.h.b16 %v299
    %v656 = vunpack.c.l.b16 %v300
    %v657 = vunpack.c.h.b16 %v300
    %v658 = vunpack.c.l.b16 %v301
    %v659 = vunpack.c.h.b16 %v301
    %v660 = vunpack.c.l.b16 %v302
    %v661 = vunpack.c.h.b16 %v302
    %v662 = vunpack.c.l.b16 %v303
    %v663 = vunpack.c.h.b16 %v303
    %v664 = vunpack.c.l.b16 %v304
    %v665 = vunpack.c.h.b16 %v304
    %v666 = vunpack.c.l.b16 %v305
    %v667 = vunpack.c.h.b16 %v305
    %v668 = vunpack.c.l.b16 %v306
    %v669 = vunpack.c.h.b16 %v306
    %v670 = vunpack.c.l.b16 %v307
    %v671 = vunpack.c.h.b16 %v307
    %v672 = vunpack.c.l.b16 %v308
    %v673 = vunpack.c.h.b16 %v308
    %v674 = vunpack.c.l.b16 %v309
    %v675 = vunpack.c.h.b16 %v309
    %v676 = vunpack.c.l.b16 %v310
    %v677 = vunpack.c.h.b16 %v310
    %v678 = vunpack.c.l.b16 %v311
    %v679 = vunpack.c.h.b16 %v311
    %v680 = vunpack.c.l.b16 %v312
    %v681 = vunpack.c.h.b16 %v312
    %v682 = vunpack.c.l.b16 %v313
    %v683 = vunpack.c.h.b16 %v313
    %v684 = vunpack.c.l.b16 %v314
    %v685 = vunpack.c.h.b16 %v314
    %v686 = vunpack.c.l.b16 %v315
    %v687 = vunpack.c.h.b16 %v315
    %v688 = vunpack.c.l.b16 %v316
    %v689 = vunpack.c.h.b16 %v316
    %v690 = vunpack.c.l.b16 %v317
    %v691 = vunpack.c.h.b16 %v317
    %v692 = vunpack.c.l.b16 %v318
    %v693 = vunpack.c.h.b16 %v318
    %v694 = vunpack.c.l.b16 %v319
    %v695 = vunpack.c.h.b16 %v319
    %v696 = vunpack.c.l.b16 %v320
    %v697 = vunpack.c.h.b16 %v320
    %v698 = vunpack.c.l.b16 %v321
    %v699 = vunpack.c.h.b16 %v321
    %v700 = vunpack.c.l.b16 %v322
    %v701 = vunpack.c.h.b16 %v322
    %v702 = vunpack.c.l.b16 %v323
    %v703 = vunpack.c.h.b16 %v323
    %v704 = vunpack.c.l.b16 %v324
    %v705 = vunpack.c.h.b16 %v324
    %v706 = vunpack.c.l.b16 %v325
    %v707 = vunpack.c.h.b16 %v325
    %v708 = vunpack.c.l.b16 %v326
    %v709 = vunpack.c.h.b16 %v326
    %v710 = vunpack.c.l.b16 %v327
    %v711 = vunpack.c.h.b16 %v327
    %v712 = vunpack.c.l.b16 %v328
    %v713 = vunpack.c.h.b16 %v328
    %v714 = vunpack.c.l.b16 %v329
    %v715 = vunpack.c.h.b16 %v329
    %v716 = vunpack.c.l.b16 %v330
    %v717 = vunpack.c.h.b16 %v330
    %v718 = vunpack.c.l.b16 %v331
    %v719 = vunpack.c.h.b16 %v331
    %v720 = vunpack.c.l.b16 %v332
    %v721 = vunpack.c.h.b16 %v332
    %v722 = vunpack.c.l.b16 %v333
    %v723 = vunpack.c.h.b16 %v333
    %v724 = vunpack.c.l.b16 %v334
    %v725 = vunpack.c.h.b16 %v334
    %v726 = vunpack.c.l.b16 %v335
    %v727 = vunpack.c.h.b16 %v335
    %v728 = vunpack.c.l.b16 %v336
    %v729 = vunpack.c.h.b16 %v336
    %v730 = vunpack.c.l.b16 %v337
    %v731 = vunpack.c.h.b16 %v337
    %v732 = vunpack.c.l.b16 %v338
    %v733 = vunpack.c.h.b16 %v338
    %v734 = vunpack.c.l.b16 %v339
    %v735 = vunpack.c.h.b16 %v339
    %v736 = vunpack.c.l.b16 %v340
    %v737 = vunpack.c.h.b16 %v340
    %v738 = vunpack.c.l.b16 %v341
    %v739 = vunpack.c.h.b16 %v341
    %v740 = vunpack.c.l.b16 %v342
    %v741 = vunpack.c.h.b16 %v342
    %v742 = vunpack.c.l.b16 %v343
    %v743 = vunpack.c.h.b16 %v343
    %v744 = vunpack.c.l.b16 %v344
    %v745 = vunpack.c.h.b16 %v344
    %v746 = vunpack.c.l.b16 %v345
    %v747 = vunpack.c.h.b16 %v345
    %v748 = vunpack.c.l.b16 %v346
    %v749 = vunpack.c.h.b16 %v346
    %v750 = vunpack.c.l.b16 %v347
    %v751 = vunpack.c.h.b16 %v347
    %v752 = vunpack.c.l.b16 %v348
    %v753 = vunpack.c.h.b16 %v348
    %v754 = vunpack.c.l.b16 %v349
    %v755 = vunpack.c.h.b16 %v349
    %v756 = vpack.c.b16 %v504, %v500
    %v757 = vpack.c.b16 %v505, %v501
    %v758 = vpack.c.b16 %v506, %v502
    %v759 = vpack.c.b16 %v507, %v503
    %v760 = vpack.c.b16 %v512, %v508
    %v761 = vpack.c.b16 %v513, %v509
    %v762 = vpack.c.b16 %v514, %v510
    %v763 = vpack.c.b16 %v515, %v511
    %v764 = vpack.c.b16 %v520, %v516
    %v765 = vpack.c.b16 %v521, %v517
    %v766 = vpack.c.b16 %v522, %v518
    %v767 = vpack.c.b16 %v523, %v519
    %v768 = vpack.c.b16 %v528, %v524
    %v769 = vpack.c.b16 %v529, %v525
    %v770 = vpack.c.b16 %v530, %v526
    %v771 = vpack.c.b16 %v531, %v527
    %v772 = vpack.c.b16 %v536, %v532
    %v773 = vpack.c.b16 %v537, %v533
    %v774 = vpack.c.b16 %v538, %v534
    %v775 = vpack.c.b16 %v539, %v535
    %v776 = vpack.c.b16 %v544, %v540
    %v777 = vpack.c.b16 %v545, %v541
    %v778 = vpack.c.b16 %v546, %v542
    %v779 = vpack.c.b16 %v547, %v543
    %v780 = vpack.c.b16 %v552, %v548
    %v781 = vpack.c.b16 %v553, %v549
    %v782 = vpack.c.b16 %v554, %v550
    %v783 = vpack.c.b16 %v555, %v551
    %v784 = vpack.c.b16 %v560, %v556
    %v785 = vpack.c.b16 %v561, %v557
    %v786 = vpack.c.b16 %v562, %v558
    %v787 = vpack.c.b16 %v563, %v559
    %v788 = vpack.c.b16 %v568, %v564
    %v789 = vpack.c.b16 %v569, %v565
    %v790 = vpack.c.b16 %v570, %v566
    %v791 = vpack.c.b16 %v571, %v567
    %v792 = vpack.c.b16 %v576, %v572
    %v793 = vpack.c.b16 %v577, %v573
    %v794 = vpack.c.b16 %v578, %v574
    %v795 = vpack.c.b16 %v579, %v575
    %v796 = vpack.c.b16 %v584, %v580
    %v797 = vpack.c.b16 %v585, %v581
    %v798 = vpack.c.b16 %v586, %v582
    %v799 = vpack.c.b16 %v587, %v583
    %v800 = vpack.c.b16 %v592, %v588
    %v801 = vpack.c.b16 %v593, %v589
    %v802 = vpack.c.b16 %v594, %v590
    %v803 = vpack.c.b16 %v595, %v591
    %v804 = vpack.c.b16 %v600, %v596
    %v805 = vpack.c.b16 %v601, %v597
    %v806 = vpack.c.b16 %v602, %v598
    %v807 = vpack.c.b16 %v603, %v599
    %v808 = vpack.c.b16 %v608, %v604
    %v809 = vpack.c.b16 %v609, %v605
    %v810 = vpack.c.b16 %v610, %v606
    %v811 = vpack.c.b16 %v611, %v607
    %v812 = vpack.c.b16 %v616, %v612
    %v813 = vpack.c.b16 %v617, %v613
    %v814 = vpack.c.b16 %v618, %v614
    %v815 = vpack.c.b16 %v619, %v615
    %v816 = vpack.c.b16 %v624, %v620
    %v817 = vpack.c.b16 %v625, %v621
    %v818 = vpack.c.b16 %v626, %v622
    %v819 = vpack.c.b16 %v627, %v623
    %v820 = vpack.c.b16 %v632, %v628
    %v821 = vpack.c.b16 %v633, %v629
    %v822 = vpack.c.b16 %v634, %v630
    %v823 = vpack.c.b16 %v635, %v631
    %v824 = vpack.c.b16 %v640, %v636
    %v825 = vpack.c.b16 %v641, %v637
    %v826 = vpack.c.b16 %v642, %v638
    %v827 = vpack.c.b16 %v643, %v639
    %v828 = vpack.c.b16 %v648, %v644
    %v829 = vpack.c.b16 %v649, %v645
    %v830 = vpack.c.b16 %v650, %v646
    %v831 = vpack.c.b16 %v651, %v647
    %v832 = vpack.c.b16 %v656, %v652
    %v833 = vpack.c.b16 %v657, %v653
    %v834 = vpack.c.b16 %v658, %v654
    %v835 = vpack.c.b16 %v659, %v655
    %v836 = vpack.c.b16 %v664, %v660
    %v837 = vpack.c.b16 %v665, %v661
    %v838 = vpack.c.b16 %v666, %v662
    %v839 = vpack.c.b16 %v667, %v663
    %v840 = vpack.c.b16 %v672, %v668
    %v841 = vpack.c.b16 %v673, %v669
    %v842 = vpack.c.b16 %v674, %v670
    %v843 = vpack.c.b16 %v675, %v671
    %v844 = vpack.c.b16 %v680, %v676
    %v845 = vpack.c.b16 %v681, %v677
    %v846 = vpack.c.b16 %v682, %v678
    %v847 = vpack.c.b16 %v683, %v679
    %v848 = vpack.c.b16 %v688, %v684
    %v849 = vpack.c.b16 %v689, %v685
    %v850 = vpack.c.b16 %v690, %v686
    %v851 = vpack.c.b16 %v691, %v687
    %v852 = vpack.c.b16 %v696, %v692
    %v853 = vpack.c.b16 %v697, %v693
    %v854 = vpack.c.b16 %v698, %v694
    %v855 = vpack.c.b16 %v699, %v695
    %v856 = vpack.c.b16 %v704, %v700
    %v857 = vpack.c.b16 %v705, %v701
    %v858 = vpack.c.b16 %v706, %v702
    %v859 = vpack.c.b16 %v707, %v703
    %v860 = vpack.c.b16 %v712, %v708
    %v861 = vpack.c.b16 %v713, %v709
    %v862 = vpack.c.b16 %v714, %v710
    %v863 = vpack.c.b16 %v715, %v711
    %v864 = vpack.c.b16 %v720, %v716
    %v865 = vpack.c.b16 %v721, %v717
    %v866 = vpack.c.b16 %v722, %v718
    %v867 = vpack.c.b16 %v723, %v719
    %v868 = vpack.c.b16 %v728, %v724
    %v869 = vpack.c.b16 %v729, %v725
    %v870 = vpack.c.b16 %v730, %v726
    %v871 = vpack.c.b16 %v731, %v727
    %v872 = vpack.c.b16 %v736, %v732
    %v873 = vpack.c.b16 %v737, %v733
    %v874 = vpack.c.b16 %v738, %v734
    %v875 = vpack.c.b16 %v739, %v735
    %v876 = vpack.c.b16 %v744, %v740
    %v877 = vpack.c.b16 %v745, %v741
    %v878 = vpack.c.b16 %v746, %v742
    %v879 = vpack.c.b16 %v747, %v743
    %v880 = vpack.c.b16 %v752, %v748
    %v881 = vpack.c.b16 %v753, %v749
    %v882 = vpack.c.b16 %v754, %v750
    %v883 = vpack.c.b16 %v755, %v751
    %1012 = vmatprep.subr.bf16.mxu0 %v757
    %1013 = vmatpush1.bf16.msra.mxu0 %v756
    %1014 = vmatprep.subr.bf16.mxu0 %v761
    %1015 = vmatpush1.bf16.msra.mxu0 %v760
    %1016 = vmatprep.subr.bf16.mxu0 %v765
    %1017 = vmatpush1.bf16.msra.mxu0 %v764
    %1018 = vmatprep.subr.bf16.mxu0 %v769
    %1019 = vmatpush1.bf16.msra.mxu0 %v768
    %1020 = vmatprep.subr.bf16.mxu0 %v773
    %1021 = vmatpush1.bf16.msra.mxu0 %v772
    %1022 = vmatprep.subr.bf16.mxu0 %v777
    %1023 = vmatpush1.bf16.msra.mxu0 %v776
    %1024 = vmatprep.subr.bf16.mxu0 %v781
    %1025 = vmatpush1.bf16.msra.mxu0 %v780
    %1026 = vmatprep.subr.bf16.mxu0 %v785
    %1027 = vmatpush1.bf16.msra.mxu0 %v784
    %1028 = vmatprep.subr.bf16.mxu0 %v789
    %1029 = vmatpush1.bf16.msra.mxu0 %v788
    %1030 = vmatprep.subr.bf16.mxu0 %v793
    %1031 = vmatpush1.bf16.msra.mxu0 %v792
    %1032 = vmatprep.subr.bf16.mxu0 %v797
    %1033 = vmatpush1.bf16.msra.mxu0 %v796
    %1034 = vmatprep.subr.bf16.mxu0 %v801
    %1035 = vmatpush1.bf16.msra.mxu0 %v800
    %1036 = vmatprep.subr.bf16.mxu0 %v805
    %1037 = vmatpush1.bf16.msra.mxu0 %v804
    %1038 = vmatprep.subr.bf16.mxu0 %v809
    %1039 = vmatpush1.bf16.msra.mxu0 %v808
    %1040 = vmatprep.subr.bf16.mxu0 %v813
    %1041 = vmatpush1.bf16.msra.mxu0 %v812
    %1042 = vmatprep.subr.bf16.mxu0 %v817
    %1043 = vmatpush1.bf16.msra.mxu0 %v816
    %1044 = vmatprep.mubr.bf16.mxu0 %v219
    %1045 = vmatmul.mubr.bf16.gmra.mrb[0].mxu0 %v218
    %v1046 = vpop.f32.mrb[0].mxu0
    %v1047 = vadd.f32 %v355, %v1046
    %v1048 = vpop.f32.mrb[0].mxu0
    %v1049 = vadd.f32 %v359, %v1048
    %v1050 = vpop.f32.mrb[0].mxu0
    %v1051 = vadd.f32 %v355, %v1050
    %v1052 = vpop.f32.mrb[0].mxu0
    %v1053 = vadd.f32 %v359, %v1052
    %1054 = vdwg.mxu0
    %1055 = vmatprep.subr.bf16.mxu0 %v821
    %1056 = vmatpush1.bf16.msra.mxu0 %v820
    %1057 = vmatprep.subr.bf16.mxu0 %v825
    %1058 = vmatpush1.bf16.msra.mxu0 %v824
    %1059 = vmatprep.subr.bf16.mxu0 %v829
    %1060 = vmatpush1.bf16.msra.mxu0 %v828
    %1061 = vmatprep.subr.bf16.mxu0 %v833
    %1062 = vmatpush1.bf16.msra.mxu0 %v832
    %1063 = vmatprep.subr.bf16.mxu0 %v837
    %1064 = vmatpush1.bf16.msra.mxu0 %v836
    %1065 = vmatprep.subr.bf16.mxu0 %v841
    %1066 = vmatpush1.bf16.msra.mxu0 %v840
    %1067 = vmatprep.subr.bf16.mxu0 %v845
    %1068 = vmatpush1.bf16.msra.mxu0 %v844
    %1069 = vmatprep.subr.bf16.mxu0 %v849
    %1070 = vmatpush1.bf16.msra.mxu0 %v848
    %1071 = vmatprep.subr.bf16.mxu0 %v853
    %1072 = vmatpush1.bf16.msra.mxu0 %v852
    %1073 = vmatprep.subr.bf16.mxu0 %v857
    %1074 = vmatpush1.bf16.msra.mxu0 %v856
    %1075 = vmatprep.subr.bf16.mxu0 %v861
    %1076 = vmatpush1.bf16.msra.mxu0 %v860
    %1077 = vmatprep.subr.bf16.mxu0 %v865
    %1078 = vmatpush1.bf16.msra.mxu0 %v864
    %1079 = vmatprep.subr.bf16.mxu0 %v869
    %1080 = vmatpush1.bf16.msra.mxu0 %v868
    %1081 = vmatprep.subr.bf16.mxu0 %v873
    %1082 = vmatpush1.bf16.msra.mxu0 %v872
    %1083 = vmatprep.subr.bf16.mxu0 %v877
    %1084 = vmatpush1.bf16.msra.mxu0 %v876
    %1085 = vmatprep.subr.bf16.mxu0 %v881
    %1086 = vmatpush1.bf16.msra.mxu0 %v880
    %1087 = vmatprep.mubr.bf16.mxu0 %v221
    %1088 = vmatmul.mubr.bf16.gmra.mrb[0].mxu0 %v220
    %v1089 = vpop.f32.mrb[0].mxu0
    %v1090 = vadd.f32 %v1047, %v1089
    %v1091 = vpop.f32.mrb[0].mxu0
    %v1092 = vadd.f32 %v1049, %v1091
    %v1093 = vpop.f32.mrb[0].mxu0
    %v1094 = vadd.f32 %v1051, %v1093
    %v1095 = vpop.f32.mrb[0].mxu0
    %v1096 = vadd.f32 %v1053, %v1095
    %1097 = vdwg.mxu0
    %1098 = vmatprep.subr.bf16.mxu0 %v759
    %1099 = vmatpush1.bf16.msra.mxu0 %v758
    %1100 = vmatprep.subr.bf16.mxu0 %v763
    %1101 = vmatpush1.bf16.msra.mxu0 %v762
    %1102 = vmatprep.subr.bf16.mxu0 %v767
    %1103 = vmatpush1.bf16.msra.mxu0 %v766
    %1104 = vmatprep.subr.bf16.mxu0 %v771
    %1105 = vmatpush1.bf16.msra.mxu0 %v770
    %1106 = vmatprep.subr.bf16.mxu0 %v775
    %1107 = vmatpush1.bf16.msra.mxu0 %v774
    %1108 = vmatprep.subr.bf16.mxu0 %v779
    %1109 = vmatpush1.bf16.msra.mxu0 %v778
    %1110 = vmatprep.subr.bf16.mxu0 %v783
    %1111 = vmatpush1.bf16.msra.mxu0 %v782
    %1112 = vmatprep.subr.bf16.mxu0 %v787
    %1113 = vmatpush1.bf16.msra.mxu0 %v786
    %1114 = vmatprep.subr.bf16.mxu0 %v791
    %1115 = vmatpush1.bf16.msra.mxu0 %v790
    %1116 = vmatprep.subr.bf16.mxu0 %v795
    %1117 = vmatpush1.bf16.msra.mxu0 %v794
    %1118 = vmatprep.subr.bf16.mxu0 %v799
    %1119 = vmatpush1.bf16.msra.mxu0 %v798
    %1120 = vmatprep.subr.bf16.mxu0 %v803
    %1121 = vmatpush1.bf16.msra.mxu0 %v802
    %1122 = vmatprep.subr.bf16.mxu0 %v807
    %1123 = vmatpush1.bf16.msra.mxu0 %v806
    %1124 = vmatprep.subr.bf16.mxu0 %v811
    %1125 = vmatpush1.bf16.msra.mxu0 %v810
    %1126 = vmatprep.subr.bf16.mxu0 %v815
    %1127 = vmatpush1.bf16.msra.mxu0 %v814
    %1128 = vmatprep.subr.bf16.mxu0 %v819
    %1129 = vmatpush1.bf16.msra.mxu0 %v818
    %1130 = vmatprep.mubr.bf16.mxu0 %v219
    %1131 = vmatmul.mubr.bf16.gmra.mrb[0].mxu0 %v218
    %v1132 = vpop.f32.mrb[0].mxu0
    %v1133 = vadd.f32 %v363, %v1132
    %v1134 = vpop.f32.mrb[0].mxu0
    %v1135 = vadd.f32 %v367, %v1134
    %v1136 = vpop.f32.mrb[0].mxu0
    %v1137 = vadd.f32 %v363, %v1136
    %v1138 = vpop.f32.mrb[0].mxu0
    %v1139 = vadd.f32 %v367, %v1138
    %1140 = vdwg.mxu0
    %1141 = vmatprep.subr.bf16.mxu0 %v823
    %1142 = vmatpush1.bf16.msra.mxu0 %v822
    %1143 = vmatprep.subr.bf16.mxu0 %v827
    %1144 = vmatpush1.bf16.msra.mxu0 %v826
    %1145 = vmatprep.subr.bf16.mxu0 %v831
    %1146 = vmatpush1.bf16.msra.mxu0 %v830
    %1147 = vmatprep.subr.bf16.mxu0 %v835
    %1148 = vmatpush1.bf16.msra.mxu0 %v834
    %1149 = vmatprep.subr.bf16.mxu0 %v839
    %1150 = vmatpush1.bf16.msra.mxu0 %v838
    %1151 = vmatprep.subr.bf16.mxu0 %v843
    %1152 = vmatpush1.bf16.msra.mxu0 %v842
    %1153 = vmatprep.subr.bf16.mxu0 %v847
    %1154 = vmatpush1.bf16.msra.mxu0 %v846
    %1155 = vmatprep.subr.bf16.mxu0 %v851
    %1156 = vmatpush1.bf16.msra.mxu0 %v850
    %1157 = vmatprep.subr.bf16.mxu0 %v855
    %1158 = vmatpush1.bf16.msra.mxu0 %v854
    %1159 = vmatprep.subr.bf16.mxu0 %v859
    %1160 = vmatpush1.bf16.msra.mxu0 %v858
    %1161 = vmatprep.subr.bf16.mxu0 %v863
    %1162 = vmatpush1.bf16.msra.mxu0 %v862
    %1163 = vmatprep.subr.bf16.mxu0 %v867
    %1164 = vmatpush1.bf16.msra.mxu0 %v866
    %1165 = vmatprep.subr.bf16.mxu0 %v871
    %1166 = vmatpush1.bf16.msra.mxu0 %v870
    %1167 = vmatprep.subr.bf16.mxu0 %v875
    %1168 = vmatpush1.bf16.msra.mxu0 %v874
    %1169 = vmatprep.subr.bf16.mxu0 %v879
    %1170 = vmatpush1.bf16.msra.mxu0 %v878
    %1171 = vmatprep.subr.bf16.mxu0 %v883
    %1172 = vmatpush1.bf16.msra.mxu0 %v882
    %1173 = vmatprep.mubr.bf16.mxu0 %v221
    %1174 = vmatmul.mubr.bf16.gmra.mrb[0].mxu0 %v220
    %v1175 = vpop.f32.mrb[0].mxu0
    %v1176 = vadd.f32 %v1133, %v1175
    %v1177 = vpop.f32.mrb[0].mxu0
    %v1178 = vadd.f32 %v1135, %v1177
    %v1179 = vpop.f32.mrb[0].mxu0
    %v1180 = vadd.f32 %v1137, %v1179
    %v1181 = vpop.f32.mrb[0].mxu0
    %v1182 = vadd.f32 %v1139, %v1181
    %1183 = vdwg.mxu0
    %v1184 = vmax.f32 %v1090, 0.0
    %v1185 = vmax.f32 %v1092, 0.0
    %v1186 = vmax.f32 %v1176, 0.0
    %v1187 = vmax.f32 %v1178, 0.0
    %v1188 = vmax.f32 %v1094, 0.0
    %v1189 = vmax.f32 %v1096, 0.0
    %v1190 = vmax.f32 %v1180, 0.0
    %v1191 = vmax.f32 %v1182, 0.0
    %v1192 = vpack.c.bf16 %v1188, %v1184
    %v1193 = vpack.c.bf16 %v1189, %v1185
    %v1194 = vpack.c.bf16 %v1190, %v1186
    %v1195 = vpack.c.bf16 %v1191, %v1187
    %v1196 = vld [vmem:[#allocation4] sm:$0xf]
    %v1197 = vld [vmem:[#allocation4 + $0x4] sm:$0xf]
    %v1198 = vld [vmem:[#allocation4 + $0x8] sm:$0xf]
    %v1199 = vld [vmem:[#allocation4 + $0xc] sm:$0xf]
    %v1200 = vld [vmem:[#allocation4 + $0x10] sm:$0xf]
    %v1201 = vld [vmem:[#allocation4 + $0x14] sm:$0xf]
    %v1202 = vld [vmem:[#allocation4 + $0x18] sm:$0xf]
    %v1203 = vld [vmem:[#allocation4 + $0x1c] sm:$0xf]
    %v1204 = vld [vmem:[#allocation4 + $0x20] sm:$0xf]
    %v1205 = vld [vmem:[#allocation4 + $0x24] sm:$0xf]
    %v1206 = vld [vmem:[#allocation4 + $0x28] sm:$0xf]
    %v1207 = vld [vmem:[#allocation4 + $0x2c] sm:$0xf]
    %v1208 = vld [vmem:[#allocation4 + $0x30] sm:$0xf]
    %v1209 = vld [vmem:[#allocation4 + $0x34] sm:$0xf]
    %v1210 = vld [vmem:[#allocation4 + $0x38] sm:$0xf]
    %v1211 = vld [vmem:[#allocation4 + $0x3c] sm:$0xf]
    %v1212 = vld [vmem:[#allocation4 + $0x40] sm:$0xf]
    %v1213 = vld [vmem:[#allocation4 + $0x44] sm:$0xf]
    %v1214 = vld [vmem:[#allocation4 + $0x48] sm:$0xf]
    %v1215 = vld [vmem:[#allocation4 + $0x4c] sm:$0xf]
    %v1216 = vld [vmem:[#allocation4 + $0x50] sm:$0xf]
    %v1217 = vld [vmem:[#allocation4 + $0x54] sm:$0xf]
    %v1218 = vld [vmem:[#allocation4 + $0x58] sm:$0xf]
    %v1219 = vld [vmem:[#allocation4 + $0x5c] sm:$0xf]
    %v1220 = vld [vmem:[#allocation4 + $0x60] sm:$0xf]
    %v1221 = vld [vmem:[#allocation4 + $0x64] sm:$0xf]
    %v1222 = vld [vmem:[#allocation4 + $0x68] sm:$0xf]
    %v1223 = vld [vmem:[#allocation4 + $0x6c] sm:$0xf]
    %v1224 = vld [vmem:[#allocation4 + $0x70] sm:$0xf]
    %v1225 = vld [vmem:[#allocation4 + $0x74] sm:$0xf]
    %v1226 = vld [vmem:[#allocation4 + $0x78] sm:$0xf]
    %v1227 = vld [vmem:[#allocation4 + $0x7c] sm:$0xf]
    %v1228 = vld [vmem:[#allocation4 + $0x80] sm:$0xf]
    %v1229 = vld [vmem:[#allocation4 + $0x84] sm:$0xf]
    %v1230 = vld [vmem:[#allocation4 + $0x88] sm:$0xf]
    %v1231 = vld [vmem:[#allocation4 + $0x8c] sm:$0xf]
    %v1232 = vld [vmem:[#allocation4 + $0x90] sm:$0xf]
    %v1233 = vld [vmem:[#allocation4 + $0x94] sm:$0xf]
    %v1234 = vld [vmem:[#allocation4 + $0x98] sm:$0xf]
    %v1235 = vld [vmem:[#allocation4 + $0x9c] sm:$0xf]
    %v1236 = vld [vmem:[#allocation4 + $0xa0] sm:$0xf]
    %v1237 = vld [vmem:[#allocation4 + $0xa4] sm:$0xf]
    %v1238 = vld [vmem:[#allocation4 + $0xa8] sm:$0xf]
    %v1239 = vld [vmem:[#allocation4 + $0xac] sm:$0xf]
    %v1240 = vld [vmem:[#allocation4 + $0xb0] sm:$0xf]
    %v1241 = vld [vmem:[#allocation4 + $0xb4] sm:$0xf]
    %v1242 = vld [vmem:[#allocation4 + $0xb8] sm:$0xf]
    %v1243 = vld [vmem:[#allocation4 + $0xbc] sm:$0xf]
    %v1244 = vld [vmem:[#allocation4 + $0xc0] sm:$0xf]
    %v1245 = vld [vmem:[#allocation4 + $0xc4] sm:$0xf]
    %v1246 = vld [vmem:[#allocation4 + $0xc8] sm:$0xf]
    %v1247 = vld [vmem:[#allocation4 + $0xcc] sm:$0xf]
    %v1248 = vld [vmem:[#allocation4 + $0xd0] sm:$0xf]
    %v1249 = vld [vmem:[#allocation4 + $0xd4] sm:$0xf]
    %v1250 = vld [vmem:[#allocation4 + $0xd8] sm:$0xf]
    %v1251 = vld [vmem:[#allocation4 + $0xdc] sm:$0xf]
    %v1252 = vld [vmem:[#allocation4 + $0xe0] sm:$0xf]
    %v1253 = vld [vmem:[#allocation4 + $0xe4] sm:$0xf]
    %v1254 = vld [vmem:[#allocation4 + $0xe8] sm:$0xf]
    %v1255 = vld [vmem:[#allocation4 + $0xec] sm:$0xf]
    %v1256 = vld [vmem:[#allocation4 + $0xf0] sm:$0xf]
    %v1257 = vld [vmem:[#allocation4 + $0xf4] sm:$0xf]
    %v1258 = vld [vmem:[#allocation4 + $0xf8] sm:$0xf]
    %v1259 = vld [vmem:[#allocation4 + $0xfc] sm:$0xf]
    %v1260 = vld [vmem:[%s6] sm:$0x1]
    %v1262 = vlaneseq
    %v1263 = vshrl.u32 %v1262, 7
    %v1264 = vsub.s32 0, %v1263
    %v1265 = vrot.slane %v1260, %v1264
    %v1331 = vunpack.c.l.b16 %v1196
    %v1332 = vunpack.c.l.b16 %v1197
    %v1333 = vunpack.c.l.b16 %v1198
    %v1334 = vunpack.c.l.b16 %v1199
    %v1335 = vunpack.c.l.b16 %v1200
    %v1336 = vunpack.c.l.b16 %v1201
    %v1337 = vunpack.c.l.b16 %v1202
    %v1338 = vunpack.c.l.b16 %v1203
    %v1339 = vunpack.c.l.b16 %v1204
    %v1340 = vunpack.c.l.b16 %v1205
    %v1341 = vunpack.c.l.b16 %v1206
    %v1342 = vunpack.c.l.b16 %v1207
    %v1343 = vunpack.c.l.b16 %v1208
    %v1344 = vunpack.c.l.b16 %v1209
    %v1345 = vunpack.c.l.b16 %v1210
    %v1346 = vunpack.c.l.b16 %v1211
    %v1347 = vunpack.c.l.b16 %v1212
    %v1348 = vunpack.c.l.b16 %v1213
    %v1349 = vunpack.c.l.b16 %v1214
    %v1350 = vunpack.c.l.b16 %v1215
    %v1351 = vunpack.c.l.b16 %v1216
    %v1352 = vunpack.c.l.b16 %v1217
    %v1353 = vunpack.c.l.b16 %v1218
    %v1354 = vunpack.c.l.b16 %v1219
    %v1355 = vunpack.c.l.b16 %v1220
    %v1356 = vunpack.c.l.b16 %v1221
    %v1357 = vunpack.c.l.b16 %v1222
    %v1358 = vunpack.c.l.b16 %v1223
    %v1359 = vunpack.c.l.b16 %v1224
    %v1360 = vunpack.c.l.b16 %v1225
    %v1361 = vunpack.c.l.b16 %v1226
    %v1362 = vunpack.c.l.b16 %v1227
    %v1363 = vunpack.c.l.b16 %v1228
    %v1364 = vunpack.c.l.b16 %v1229
    %v1365 = vunpack.c.l.b16 %v1230
    %v1366 = vunpack.c.l.b16 %v1231
    %v1367 = vunpack.c.l.b16 %v1232
    %v1368 = vunpack.c.l.b16 %v1233
    %v1369 = vunpack.c.l.b16 %v1234
    %v1370 = vunpack.c.l.b16 %v1235
    %v1371 = vunpack.c.l.b16 %v1236
    %v1372 = vunpack.c.l.b16 %v1237
    %v1373 = vunpack.c.l.b16 %v1238
    %v1374 = vunpack.c.l.b16 %v1239
    %v1375 = vunpack.c.l.b16 %v1240
    %v1376 = vunpack.c.l.b16 %v1241
    %v1377 = vunpack.c.l.b16 %v1242
    %v1378 = vunpack.c.l.b16 %v1243
    %v1379 = vunpack.c.l.b16 %v1244
    %v1380 = vunpack.c.l.b16 %v1245
    %v1381 = vunpack.c.l.b16 %v1246
    %v1382 = vunpack.c.l.b16 %v1247
    %v1383 = vunpack.c.l.b16 %v1248
    %v1384 = vunpack.c.l.b16 %v1249
    %v1385 = vunpack.c.l.b16 %v1250
    %v1386 = vunpack.c.l.b16 %v1251
    %v1387 = vunpack.c.l.b16 %v1252
    %v1388 = vunpack.c.l.b16 %v1253
    %v1389 = vunpack.c.l.b16 %v1254
    %v1390 = vunpack.c.l.b16 %v1255
    %v1391 = vunpack.c.l.b16 %v1256
    %v1392 = vunpack.c.l.b16 %v1257
    %v1393 = vunpack.c.l.b16 %v1258
    %v1394 = vunpack.c.l.b16 %v1259
    %v1395 = vpack.c.b16 %v1332, %v1331
    %v1396 = vpack.c.b16 %v1334, %v1333
    %v1397 = vpack.c.b16 %v1336, %v1335
    %v1398 = vpack.c.b16 %v1338, %v1337
    %v1399 = vpack.c.b16 %v1340, %v1339
    %v1400 = vpack.c.b16 %v1342, %v1341
    %v1401 = vpack.c.b16 %v1344, %v1343
    %v1402 = vpack.c.b16 %v1346, %v1345
    %v1403 = vpack.c.b16 %v1348, %v1347
    %v1404 = vpack.c.b16 %v1350, %v1349
    %v1405 = vpack.c.b16 %v1352, %v1351
    %v1406 = vpack.c.b16 %v1354, %v1353
    %v1407 = vpack.c.b16 %v1356, %v1355
    %v1408 = vpack.c.b16 %v1358, %v1357
    %v1409 = vpack.c.b16 %v1360, %v1359
    %v1410 = vpack.c.b16 %v1362, %v1361
    %v1411 = vpack.c.b16 %v1364, %v1363
    %v1412 = vpack.c.b16 %v1366, %v1365
    %v1413 = vpack.c.b16 %v1368, %v1367
    %v1414 = vpack.c.b16 %v1370, %v1369
    %v1415 = vpack.c.b16 %v1372, %v1371
    %v1416 = vpack.c.b16 %v1374, %v1373
    %v1417 = vpack.c.b16 %v1376, %v1375
    %v1418 = vpack.c.b16 %v1378, %v1377
    %v1419 = vpack.c.b16 %v1380, %v1379
    %v1420 = vpack.c.b16 %v1382, %v1381
    %v1421 = vpack.c.b16 %v1384, %v1383
    %v1422 = vpack.c.b16 %v1386, %v1385
    %v1423 = vpack.c.b16 %v1388, %v1387
    %v1424 = vpack.c.b16 %v1390, %v1389
    %v1425 = vpack.c.b16 %v1392, %v1391
    %v1426 = vpack.c.b16 %v1394, %v1393
    %1459 = vmatprep.subr.bf16.mxu0 0
    %1460 = vmatpush1.bf16.msra.mxu0 %v1395
    %1461 = vmatprep.subr.bf16.mxu0 0
    %1462 = vmatpush1.bf16.msra.mxu0 %v1396
    %1463 = vmatprep.subr.bf16.mxu0 0
    %1464 = vmatpush1.bf16.msra.mxu0 %v1397
    %1465 = vmatprep.subr.bf16.mxu0 0
    %1466 = vmatpush1.bf16.msra.mxu0 %v1398
    %1467 = vmatprep.subr.bf16.mxu0 0
    %1468 = vmatpush1.bf16.msra.mxu0 %v1399
    %1469 = vmatprep.subr.bf16.mxu0 0
    %1470 = vmatpush1.bf16.msra.mxu0 %v1400
    %1471 = vmatprep.subr.bf16.mxu0 0
    %1472 = vmatpush1.bf16.msra.mxu0 %v1401
    %1473 = vmatprep.subr.bf16.mxu0 0
    %1474 = vmatpush1.bf16.msra.mxu0 %v1402
    %1475 = vmatprep.subr.bf16.mxu0 0
    %1476 = vmatpush1.bf16.msra.mxu0 %v1403
    %1477 = vmatprep.subr.bf16.mxu0 0
    %1478 = vmatpush1.bf16.msra.mxu0 %v1404
    %1479 = vmatprep.subr.bf16.mxu0 0
    %1480 = vmatpush1.bf16.msra.mxu0 %v1405
    %1481 = vmatprep.subr.bf16.mxu0 0
    %1482 = vmatpush1.bf16.msra.mxu0 %v1406
    %1483 = vmatprep.subr.bf16.mxu0 0
    %1484 = vmatpush1.bf16.msra.mxu0 %v1407
    %1485 = vmatprep.subr.bf16.mxu0 0
    %1486 = vmatpush1.bf16.msra.mxu0 %v1408
    %1487 = vmatprep.subr.bf16.mxu0 0
    %1488 = vmatpush1.bf16.msra.mxu0 %v1409
    %1489 = vmatprep.subr.bf16.mxu0 0
    %1490 = vmatpush1.bf16.msra.mxu0 %v1410
    %1491 = vmatprep.mubr.bf16.mxu0 %v1193
    %1492 = vmatmul.mubr.bf16.gmra.mrb[0].mxu0 %v1192
    %v1493 = vpop.f32.mrb[0].mxu0
    %v1494 = vadd.f32 %v1265, %v1493
    %v1495 = vpop.f32.mrb[0].mxu0
    %v1496 = vpop.f32.mrb[0].mxu0
    %v1497 = vadd.f32 %v1265, %v1496
    %v1498 = vpop.f32.mrb[0].mxu0
    %1499 = vdwg.mxu0
    %1500 = vmatprep.subr.bf16.mxu0 0
    %1501 = vmatpush1.bf16.msra.mxu0 %v1411
    %1502 = vmatprep.subr.bf16.mxu0 0
    %1503 = vmatpush1.bf16.msra.mxu0 %v1412
    %1504 = vmatprep.subr.bf16.mxu0 0
    %1505 = vmatpush1.bf16.msra.mxu0 %v1413
    %1506 = vmatprep.subr.bf16.mxu0 0
    %1507 = vmatpush1.bf16.msra.mxu0 %v1414
    %1508 = vmatprep.subr.bf16.mxu0 0
    %1509 = vmatpush1.bf16.msra.mxu0 %v1415
    %1510 = vmatprep.subr.bf16.mxu0 0
    %1511 = vmatpush1.bf16.msra.mxu0 %v1416
    %1512 = vmatprep.subr.bf16.mxu0 0
    %1513 = vmatpush1.bf16.msra.mxu0 %v1417
    %1514 = vmatprep.subr.bf16.mxu0 0
    %1515 = vmatpush1.bf16.msra.mxu0 %v1418
    %1516 = vmatprep.subr.bf16.mxu0 0
    %1517 = vmatpush1.bf16.msra.mxu0 %v1419
    %1518 = vmatprep.subr.bf16.mxu0 0
    %1519 = vmatpush1.bf16.msra.mxu0 %v1420
    %1520 = vmatprep.subr.bf16.mxu0 0
    %1521 = vmatpush1.bf16.msra.mxu0 %v1421
    %1522 = vmatprep.subr.bf16.mxu0 0
    %1523 = vmatpush1.bf16.msra.mxu0 %v1422
    %1524 = vmatprep.subr.bf16.mxu0 0
    %1525 = vmatpush1.bf16.msra.mxu0 %v1423
    %1526 = vmatprep.subr.bf16.mxu0 0
    %1527 = vmatpush1.bf16.msra.mxu0 %v1424
    %1528 = vmatprep.subr.bf16.mxu0 0
    %1529 = vmatpush1.bf16.msra.mxu0 %v1425
    %1530 = vmatprep.subr.bf16.mxu0 0
    %1531 = vmatpush1.bf16.msra.mxu0 %v1426
    %1532 = vmatprep.mubr.bf16.mxu0 %v1195
    %1533 = vmatmul.mubr.bf16.gmra.mrb[0].mxu0 %v1194
    %v1534 = vpop.f32.mrb[0].mxu0
    %v1535 = vadd.f32 %v1494, %v1534
    %v1536 = vpop.f32.mrb[0].mxu0
    %v1537 = vpop.f32.mrb[0].mxu0
    %v1538 = vadd.f32 %v1497, %v1537
    %v1539 = vpop.f32.mrb[0].mxu0
    %1540 = vdwg.mxu0
    %v1541 = vsub.f32 0.0, %v1535
    %v1542 = vsub.f32 0.0, %v1538
    %v1543 = vmul.f32 %v1541, 1.442695
    %v1544 = vpow.pop %v1543
    %v1545 = vmul.f32 %v1542, 1.442695
    %v1546 = vpow.pop %v1545
    %v1547 = vadd.f32 %v1544, 1.0
    %v1548 = vadd.f32 %v1546, 1.0
    %v1549 = vrcp.pop %v1547
    %v1550 = vrcp.pop %v1548
    %v1551 = vpack.c.bf16 %v1550, %v1549
    %v1553 = vunpack.c.l.b16 %v1551
    %v1554 = vunpack.c.h.b16 %v1551
    %v1555 = vpack.c.b16 %v1553, %v1553
    %v1556 = vpack.c.b16 %v1554, %v1554
    %1559 = vst [vmem:[%s7] sm:$0xf] %v1555
    %1560 = vst [vmem:[%s7 + $0x4] sm:$0xf] %v1556
    // Predicated region
    $region38: #{discriminator_forward.1} parent=1 // pred_check
      _
    $region39: #{discriminator_forward.1} parent=1 // pred_check_branch
      %1562 = sbr.rel (0) target = $region41
    $region40: #{discriminator_forward.1} parent=1 // pred_region
      _
    $region41: #{discriminator_forward.1} parent=1 // pred_fallthru
      _
    // Predicated region
    $region42: #{discriminator_forward.1} parent=1 // pred_check
      _
    $region43: #{discriminator_forward.1} parent=1 // pred_check_branch
      %1564 = sbr.rel (0) target = $region45
    $region44: #{discriminator_forward.1} parent=1 // pred_region
      _
    $region45: #{discriminator_forward.1} parent=1 // pred_fallthru
      _
    %1565 = vsyncpa [#allocation3], 1
    %1566 = vsyncpa [#allocation5], 1

</llo_original>
